<compile_context>
chip_gen: v6e
topology: v6e:2x2x1
jax: 0.10.0
libtpu: 0.0.40
codegen_flags: <defaults>
</compile_context>

<pallas_src>
import jax
import jax.numpy as jnp
from jax.experimental import pallas as pl
from jax.experimental.pallas import tpu as pltpu

D_IN = 784          # 1 * 28 * 28
K_PAD = 896         # 7 * 128   (padded fc1 contraction dim)
HIDDEN = 512
NUM_CLASSES = 10
C_PAD = 128         # lane-dense padded class dim


def _round_up(n, m):
    return ((n + m - 1) // m) * m


def mlp_kernel(x_ref, w1_ref, b1_ref, w2_ref, b2_ref, w3_ref, b3_ref, o_ref):
    # fc1 + relu : bf16 operands on the MXU, f32 accumulation.
    h1 = jnp.dot(x_ref[...], w1_ref[...], preferred_element_type=jnp.float32)
    h1 = jnp.maximum(h1 + b1_ref[...], 0.0)
    # fc2 + relu
    h2 = jnp.dot(h1.astype(jnp.bfloat16), w2_ref[...],
                 preferred_element_type=jnp.float32)
    h2 = jnp.maximum(h2 + b2_ref[...], 0.0)
    # fc3 (class dim padded to 128 lanes)
    logits = jnp.dot(h2.astype(jnp.bfloat16), w3_ref[...],
                     preferred_element_type=jnp.float32)
    logits = logits + b3_ref[...]
    # Mask padded class lanes so they don't perturb the LSE.
    col = jax.lax.broadcasted_iota(jnp.int32, logits.shape, 1)
    logits = jnp.where(col < NUM_CLASSES, logits, jnp.float32(-1e30))
    # log_softmax along the class axis (dim=1 in PyTorch == last axis here).
    m = jnp.max(logits, axis=-1, keepdims=True)
    shifted = logits - m
    lse = jnp.log(jnp.sum(jnp.exp(shifted), axis=-1, keepdims=True))
    o_ref[...] = (shifted - lse).astype(o_ref.dtype)


def prepare_params(params):
    """Kernel-layout params: (in, out) bf16 weights padded to the kernel's
    K / class padding; biases kept f32 as (1, out) rows."""
    w1, b1, w2, b2, w3, b3 = params
    w1p = jnp.zeros((K_PAD, HIDDEN), jnp.float32).at[:D_IN, :].set(w1)
    w3p = jnp.zeros((HIDDEN, C_PAD), jnp.float32).at[:, :NUM_CLASSES].set(w3)
    b3p = jnp.zeros((1, C_PAD), jnp.float32).at[:, :NUM_CLASSES].set(b3)
    return (w1p.astype(jnp.bfloat16), b1.astype(jnp.float32),
            w2.astype(jnp.bfloat16), b2.astype(jnp.float32),
            w3p.astype(jnp.bfloat16), b3p)


def net_forward(x_nchw, kparams, tb=256):
    w1, b1, w2, b2, w3, b3 = kparams
    B = x_nchw.shape[0]
    x = x_nchw.reshape(B, -1).astype(jnp.float32)        # torch.flatten(x, 1)

    # Batch tile: multiple of 32 (bf16 sublane packing), capped at `tb`.
    tb = max(32, min(_round_up(tb, 32), _round_up(B, 32)))
    b_pad = _round_up(B, tb)

    # Zero-pad batch to a tile multiple and features 784 -> 896; cast to bf16.
    xp = jnp.zeros((b_pad, K_PAD), jnp.float32).at[:B, :D_IN].set(x)
    xp = xp.astype(jnp.bfloat16)

    grid = (b_pad // tb,)
    const = lambda shape: pl.BlockSpec(shape, lambda i: (0, 0))

    flops = 2 * b_pad * (K_PAD * HIDDEN + HIDDEN * HIDDEN + HIDDEN * C_PAD)
    bytes_accessed = (xp.size * 2
                      + (w1.size + w2.size + w3.size) * 2
                      + (b1.size + b2.size + b3.size) * 4
                      + b_pad * C_PAD * 4)
    cost = pl.CostEstimate(flops=flops,
                           transcendentals=b_pad * (C_PAD + 1),
                           bytes_accessed=bytes_accessed)

    out_padded = pl.pallas_call(
        mlp_kernel,
        out_shape=jax.ShapeDtypeStruct((b_pad, C_PAD), jnp.float32),
        grid=grid,
        in_specs=[
            pl.BlockSpec((tb, K_PAD), lambda i: (i, 0)),   # x tile (pipelined)
            const((K_PAD, HIDDEN)), const((1, HIDDEN)),    # fc1 (VMEM-resident)
            const((HIDDEN, HIDDEN)), const((1, HIDDEN)),   # fc2 (VMEM-resident)
            const((HIDDEN, C_PAD)), const((1, C_PAD)),     # fc3 (VMEM-resident)
        ],
        out_specs=pl.BlockSpec((tb, C_PAD), lambda i: (i, 0)),
        compiler_params=pltpu.CompilerParams(
            dimension_semantics=("parallel",)),
        cost_estimate=cost,
    )(xp, w1, b1, w2, b2, w3, b3)

    # Drop batch padding and the 118 padded class lanes.
    return out_padded[:B, :NUM_CLASSES]


def init_params(key):
    """Deterministic init mimicking PyTorch nn.Linear default
    (U[-1/sqrt(fan_in), 1/sqrt(fan_in)]). Weights stored as (in, out) == W.T"""
    def linear(key, fan_in, fan_out):
        kw, kb = jax.random.split(key)
        bound = 1.0 / jnp.sqrt(fan_in)
        w = jax.random.uniform(kw, (fan_in, fan_out), jnp.float32, -bound, bound)
        b = jax.random.uniform(kb, (1, fan_out), jnp.float32, -bound, bound)
        return w, b

    k1, k2, k3 = jax.random.split(key, 3)
    w1, b1 = linear(k1, 784, 512)
    w2, b2 = linear(k2, 512, 512)
    w3, b3 = linear(k3, 512, 10)
    return (w1, b1, w2, b2, w3, b3)


def reference_forward(x_nchw, params):
    """Pure-JAX reference replicating the kernel's bf16-weight / f32-accumulate math."""
    w1, b1, w2, b2, w3, b3 = params
    x = x_nchw.reshape(x_nchw.shape[0], -1).astype(jnp.bfloat16)
    h1 = jnp.maximum(
        jnp.dot(x, w1.astype(jnp.bfloat16),
                preferred_element_type=jnp.float32) + b1, 0.0)
    h2 = jnp.maximum(
        jnp.dot(h1.astype(jnp.bfloat16), w2.astype(jnp.bfloat16),
                preferred_element_type=jnp.float32) + b2, 0.0)
    logits = jnp.dot(h2.astype(jnp.bfloat16), w3.astype(jnp.bfloat16),
                     preferred_element_type=jnp.float32) + b3
    return jax.nn.log_softmax(logits, axis=-1)


if __name__ == "__main__":
    key = jax.random.PRNGKey(0)
    kx, kp = jax.random.split(key)

    # MNIST-shaped input: (batch=2, channels=1, 28, 28) NCHW
    x = jax.random.normal(kx, (2, 1, 28, 28), jnp.float32)
    params = init_params(kp)
    kparams = prepare_params(params)

    out = net_forward(x, kparams)
    out = jax.block_until_ready(out)

    ref = reference_forward(x, params)
    assert out.shape == (2, 10)
    assert jnp.allclose(out, ref, atol=1e-3, rtol=1e-3), "mismatch vs reference"

    print("KERNEL_OK")
</pallas_src>

<mosaic_0001>
module attributes {stable_mosaic.version = 11 : i64} {
  func.func @mlp_kernel(%arg0: i32, %arg1: memref<32x896xbf16, #tpu.memory_space<vmem>>, %arg2: memref<896x512xbf16, #tpu.memory_space<vmem>>, %arg3: memref<1x512xf32, #tpu.memory_space<vmem>>, %arg4: memref<512x512xbf16, #tpu.memory_space<vmem>>, %arg5: memref<1x512xf32, #tpu.memory_space<vmem>>, %arg6: memref<512x128xbf16, #tpu.memory_space<vmem>>, %arg7: memref<1x128xf32, #tpu.memory_space<vmem>>, %arg8: memref<32x128xf32, #tpu.memory_space<vmem>>) attributes {dimension_semantics = [#tpu.dimension_semantics<parallel>], iteration_bounds = array<i64: 1>, scalar_prefetch = 0 : i64, scratch_operands = 0 : i64, tpu.core_type = #tpu.core_type<tc>, window_params = [{transform_indices = @transform_0, window_bounds = array<i64: 32, 896>}, {pipeline_mode = #tpu.pipeline_mode<synchronous>, transform_indices = @transform_1, window_bounds = array<i64: 896, 512>}, {pipeline_mode = #tpu.pipeline_mode<synchronous>, transform_indices = @transform_2, window_bounds = array<i64: 1, 512>}, {pipeline_mode = #tpu.pipeline_mode<synchronous>, transform_indices = @transform_3, window_bounds = array<i64: 512, 512>}, {pipeline_mode = #tpu.pipeline_mode<synchronous>, transform_indices = @transform_4, window_bounds = array<i64: 1, 512>}, {pipeline_mode = #tpu.pipeline_mode<synchronous>, transform_indices = @transform_5, window_bounds = array<i64: 512, 128>}, {pipeline_mode = #tpu.pipeline_mode<synchronous>, transform_indices = @transform_6, window_bounds = array<i64: 1, 128>}, {transform_indices = @transform_7, window_bounds = array<i64: 32, 128>}]} {
    %c0 = arith.constant 0 : index
    %c0_0 = arith.constant 0 : index
    %0 = vector.load %arg1[%c0, %c0_0] : memref<32x896xbf16, #tpu.memory_space<vmem>>, vector<32x896xbf16>
    %c0_1 = arith.constant 0 : index
    %c0_2 = arith.constant 0 : index
    %1 = vector.load %arg2[%c0_1, %c0_2] : memref<896x512xbf16, #tpu.memory_space<vmem>>, vector<896x512xbf16>
    %cst = arith.constant dense<0.000000e+00> : vector<32x512xf32>
    %2 = tpu.matmul %0, %1, %cst {dimension_numbers = #tpu.dot_dimension_numbers<[1], [0], [0], [1], [0, 0, 1, 1], [], []>} : vector<32x896xbf16>, vector<896x512xbf16>, vector<32x512xf32> -> vector<32x512xf32>
    %c0_3 = arith.constant 0 : index
    %c0_4 = arith.constant 0 : index
    %3 = vector.load %arg3[%c0_3, %c0_4] : memref<1x512xf32, #tpu.memory_space<vmem>>, vector<1x512xf32>
    %4 = vector.broadcast %3 : vector<1x512xf32> to vector<32x512xf32>
    %5 = arith.addf %2, %4 : vector<32x512xf32>
    %cst_5 = arith.constant 0.000000e+00 : f32
    %6 = vector.broadcast %cst_5 : f32 to vector<32x512xf32>
    %7 = arith.maximumf %5, %6 : vector<32x512xf32>
    %8 = arith.truncf %7 : vector<32x512xf32> to vector<32x512xbf16>
    %c0_6 = arith.constant 0 : index
    %c0_7 = arith.constant 0 : index
    %9 = vector.load %arg4[%c0_6, %c0_7] : memref<512x512xbf16, #tpu.memory_space<vmem>>, vector<512x512xbf16>
    %cst_8 = arith.constant dense<0.000000e+00> : vector<32x512xf32>
    %10 = tpu.matmul %8, %9, %cst_8 {dimension_numbers = #tpu.dot_dimension_numbers<[1], [0], [0], [1], [0, 0, 1, 1], [], []>} : vector<32x512xbf16>, vector<512x512xbf16>, vector<32x512xf32> -> vector<32x512xf32>
    %c0_9 = arith.constant 0 : index
    %c0_10 = arith.constant 0 : index
    %11 = vector.load %arg5[%c0_9, %c0_10] : memref<1x512xf32, #tpu.memory_space<vmem>>, vector<1x512xf32>
    %12 = vector.broadcast %11 : vector<1x512xf32> to vector<32x512xf32>
    %13 = arith.addf %10, %12 : vector<32x512xf32>
    %cst_11 = arith.constant 0.000000e+00 : f32
    %14 = vector.broadcast %cst_11 : f32 to vector<32x512xf32>
    %15 = arith.maximumf %13, %14 : vector<32x512xf32>
    %16 = arith.truncf %15 : vector<32x512xf32> to vector<32x512xbf16>
    %c0_12 = arith.constant 0 : index
    %c0_13 = arith.constant 0 : index
    %17 = vector.load %arg6[%c0_12, %c0_13] : memref<512x128xbf16, #tpu.memory_space<vmem>>, vector<512x128xbf16>
    %cst_14 = arith.constant dense<0.000000e+00> : vector<32x128xf32>
    %18 = tpu.matmul %16, %17, %cst_14 {dimension_numbers = #tpu.dot_dimension_numbers<[1], [0], [0], [1], [0, 0, 1, 1], [], []>} : vector<32x512xbf16>, vector<512x128xbf16>, vector<32x128xf32> -> vector<32x128xf32>
    %c0_15 = arith.constant 0 : index
    %c0_16 = arith.constant 0 : index
    %19 = vector.load %arg7[%c0_15, %c0_16] : memref<1x128xf32, #tpu.memory_space<vmem>>, vector<1x128xf32>
    %20 = vector.broadcast %19 : vector<1x128xf32> to vector<32x128xf32>
    %21 = arith.addf %18, %20 : vector<32x128xf32>
    %22 = tpu.iota {dimensions = array<i32: 1>} : vector<32x128xi32>
    %c10_i32 = arith.constant 10 : i32
    %23 = vector.broadcast %c10_i32 : i32 to vector<32x128xi32>
    %24 = arith.cmpi slt, %22, %23 : vector<32x128xi32>
    %cst_17 = arith.constant -1.000000e+30 : f32
    %25 = vector.broadcast %cst_17 : f32 to vector<32x128xf32>
    %26 = arith.select %24, %21, %25 : vector<32x128xi1>, vector<32x128xf32>
    %cst_18 = arith.constant dense<0xFF800000> : vector<32xf32>
    %27 = vector.multi_reduction <maximumf>, %26, %cst_18 [1] : vector<32x128xf32> to vector<32xf32>
    %28 = vector.shape_cast %27 : vector<32xf32> to vector<32x1xf32>
    %29 = vector.broadcast %28 : vector<32x1xf32> to vector<32x128xf32>
    %30 = arith.subf %26, %29 : vector<32x128xf32>
    %31 = math.exp %30 : vector<32x128xf32>
    %cst_19 = arith.constant dense<0.000000e+00> : vector<32xf32>
    %32 = vector.multi_reduction <add>, %31, %cst_19 [1] : vector<32x128xf32> to vector<32xf32>
    %33 = vector.shape_cast %32 : vector<32xf32> to vector<32x1xf32>
    %34 = math.log %33 : vector<32x1xf32>
    %35 = vector.broadcast %34 : vector<32x1xf32> to vector<32x128xf32>
    %36 = arith.subf %30, %35 : vector<32x128xf32>
    %c0_20 = arith.constant 0 : index
    %c0_21 = arith.constant 0 : index
    %37 = vector.load %arg8[%c0_20, %c0_21] : memref<32x128xf32, #tpu.memory_space<vmem>>, vector<32x128xf32>
    tpu.vector_store %arg8[%c0_20, %c0_21], %36 {strides = array<i32>} : memref<32x128xf32, #tpu.memory_space<vmem>>, vector<32x128xf32>,
    return
  }
  func.func @transform_0(%arg0: i32) -> (i32, i32) {
    %c0_i32 = arith.constant 0 : i32
    %c0_i32_0 = arith.constant 0 : i32
    return %arg0, %c0_i32 : i32, i32
  }
  func.func @transform_1(%arg0: i32) -> (i32, i32) {
    %c0_i32 = arith.constant 0 : i32
    %c0_i32_0 = arith.constant 0 : i32
    %c0_i32_1 = arith.constant 0 : i32
    return %c0_i32, %c0_i32_0 : i32, i32
  }
  func.func @transform_2(%arg0: i32) -> (i32, i32) {
    %c0_i32 = arith.constant 0 : i32
    %c0_i32_0 = arith.constant 0 : i32
    %c0_i32_1 = arith.constant 0 : i32
    return %c0_i32, %c0_i32_0 : i32, i32
  }
  func.func @transform_3(%arg0: i32) -> (i32, i32) {
    %c0_i32 = arith.constant 0 : i32
    %c0_i32_0 = arith.constant 0 : i32
    %c0_i32_1 = arith.constant 0 : i32
    return %c0_i32, %c0_i32_0 : i32, i32
  }
  func.func @transform_4(%arg0: i32) -> (i32, i32) {
    %c0_i32 = arith.constant 0 : i32
    %c0_i32_0 = arith.constant 0 : i32
    %c0_i32_1 = arith.constant 0 : i32
    return %c0_i32, %c0_i32_0 : i32, i32
  }
  func.func @transform_5(%arg0: i32) -> (i32, i32) {
    %c0_i32 = arith.constant 0 : i32
    %c0_i32_0 = arith.constant 0 : i32
    %c0_i32_1 = arith.constant 0 : i32
    return %c0_i32, %c0_i32_0 : i32, i32
  }
  func.func @transform_6(%arg0: i32) -> (i32, i32) {
    %c0_i32 = arith.constant 0 : i32
    %c0_i32_0 = arith.constant 0 : i32
    %c0_i32_1 = arith.constant 0 : i32
    return %c0_i32, %c0_i32_0 : i32, i32
  }
  func.func @transform_7(%arg0: i32) -> (i32, i32) {
    %c0_i32 = arith.constant 0 : i32
    %c0_i32_0 = arith.constant 0 : i32
    return %arg0, %c0_i32 : i32, i32
  }
}

</mosaic_0001>

<llo_original>
// kernel: tpu_custom_call.1
$region0: #{tpu_custom_call.1}
  #allocation0 [shape = 'u32[]', space=smem, size = 0x4, offset = 0x4, fixed_abs, tag = 'smem constant byte address 0x4 - core index']
  #allocation1 [shape = 'u32[144,128]{1,0:T(1,128)}', space=vmem, size = 0x12000, scoped, tag = 'internal scratch']
  %s0 = inlined_call_operand.hbm [shape: bf16[32,896], index: 0, kind: input, shape index: {}]
  %s1 = inlined_call_operand.hbm [shape: bf16[896,512], index: 1, kind: input, shape index: {}]
  %s2 = inlined_call_operand.hbm [shape: f32[1,512], index: 2, kind: input, shape index: {}]
  %s3 = inlined_call_operand.hbm [shape: bf16[512,512], index: 3, kind: input, shape index: {}]
  %s4 = inlined_call_operand.vmem [shape: f32[1,512], index: 4, kind: input, shape index: {}]
  %s5 = inlined_call_operand.hbm [shape: bf16[512,128], index: 5, kind: input, shape index: {}]
  %s6 = inlined_call_operand.vmem [shape: f32[1,128], index: 6, kind: input, shape index: {}]
  %s7 = inlined_call_operand.hbm [shape: f32[32,128], index: 7, kind: output, shape index: {}]
  %s8 = sld [smem:[#allocation0]]
  $region58: #{tpu_custom_call.1} parent=0
    _
  %s10 = ssub.s32 1, %s8
  %s11 = scalar_select 0, %s10, %s8
  $region1: #{tpu_custom_call.1} parent=0
    #allocation2 [shape = 'u8[57344]{0}', space=vmem, size = 0xe000, scoped, tag = 'input window, operand 0, single buffered']
    #allocation3 [shape = 's32[1]{0}', space=sflag, size = 0x4, scoped, tag = 'scoped memory for tpu_custom_call.1']
    #allocation4 [shape = 's32[1]{0}', space=sflag, size = 0x4, scoped, tag = 'scoped memory for tpu_custom_call.1']
    #allocation5 [shape = 'u8[917504]{0}', space=vmem, size = 0xe0000, scoped, tag = 'input window, operand 1, single buffered']
    #allocation6 [shape = 's32[1]{0}', space=sflag, size = 0x4, scoped, tag = 'scoped memory for tpu_custom_call.1']
    #allocation7 [shape = 'u8[2048]{0}', space=vmem, size = 0x800, scoped, tag = 'input window, operand 2, single buffered']
    #allocation8 [shape = 'u8[524288]{0}', space=vmem, size = 0x80000, scoped, tag = 'input window, operand 3, single buffered']
    #allocation9 [shape = 's32[1]{0}', space=sflag, size = 0x4, scoped, tag = 'scoped memory for tpu_custom_call.1']
    #allocation10 [shape = 'u8[131072]{0}', space=vmem, size = 0x20000, scoped, tag = 'input window, operand 5, single buffered']
    #allocation11 [shape = 'u8[16384]{0}', space=vmem, size = 0x4000, scoped, tag = 'output window, operand 0, single buffered']
    %12 = vsyncpa [#allocation3], 0
    %13 = vsyncpa [#allocation6], 0
    %14 = vsyncpa [#allocation9], 0
    %15 = vsyncpa [#allocation4], 0
    // Predicated region
    $region2: #{tpu_custom_call.1} parent=1 // pred_check
      _
    $region3: #{tpu_custom_call.1} parent=1 // pred_check_branch
      %17 = sbr.rel (0) target = $region5
    $region4: #{tpu_custom_call.1} parent=1 // pred_region
      %s19 = ssub.s32 1792, 1792
      %20 = vsyncadd [#allocation3], %s19
      %s21 = sshll.u32 [#allocation2], 4
      %s22 = int_to_ptr.vmem [resolvable:$true] %s21
      %27 = dma.hbm_to_vmem [thread:$0]  %s0, 1792, %s22, [#allocation3], 448, 448, 28
    $region5: #{tpu_custom_call.1} parent=1 // pred_fallthru
      _
    // Predicated region
    $region6: #{tpu_custom_call.1} parent=1 // pred_check
      _
    $region7: #{tpu_custom_call.1} parent=1 // pred_check_branch
      %29 = sbr.rel (0) target = $region9
    $region8: #{tpu_custom_call.1} parent=1 // pred_region
      %s31 = ssub.s32 28672, 28672
      %32 = vsyncadd [#allocation6], %s31
      %s33 = sshll.u32 [#allocation5], 4
      %s34 = int_to_ptr.vmem [resolvable:$true] %s33
      %39 = dma.hbm_to_vmem [thread:$0]  %s1, 28672, %s34, [#allocation6], 256, 256, 16
    $region9: #{tpu_custom_call.1} parent=1 // pred_fallthru
      _
    // Predicated region
    $region10: #{tpu_custom_call.1} parent=1 // pred_check
      _
    $region11: #{tpu_custom_call.1} parent=1 // pred_check_branch
      %41 = sbr.rel (0) target = $region13
    $region12: #{tpu_custom_call.1} parent=1 // pred_region
      %s43 = ssub.s32 64, 64
      %44 = vsyncadd [#allocation6], %s43
      %s46 = sshll.u32 [#allocation7], 4
      %s47 = int_to_ptr.vmem [resolvable:$true] %s46
      %49 = dma.hbm_to_vmem [thread:$0]  %s2, 64, %s47, [#allocation6]
    $region13: #{tpu_custom_call.1} parent=1 // pred_fallthru
      _
    // Predicated region
    $region14: #{tpu_custom_call.1} parent=1 // pred_check
      _
    $region15: #{tpu_custom_call.1} parent=1 // pred_check_branch
      %51 = sbr.rel (0) target = $region17
    $region16: #{tpu_custom_call.1} parent=1 // pred_region
      %s53 = ssub.s32 16384, 16384
      %54 = vsyncadd [#allocation9], %s53
      %s55 = sshll.u32 [#allocation8], 4
      %s56 = int_to_ptr.vmem [resolvable:$true] %s55
      %61 = dma.hbm_to_vmem [thread:$0]  %s3, 16384, %s56, [#allocation9], 256, 256, 16
    $region17: #{tpu_custom_call.1} parent=1 // pred_fallthru
      _
    // Predicated region
    $region18: #{tpu_custom_call.1} parent=1 // pred_check
      _
    $region19: #{tpu_custom_call.1} parent=1 // pred_check_branch
      %63 = sbr.rel (0) target = $region21
    $region20: #{tpu_custom_call.1} parent=1 // pred_region
      _
    $region21: #{tpu_custom_call.1} parent=1 // pred_fallthru
      _
    // Predicated region
    $region22: #{tpu_custom_call.1} parent=1 // pred_check
      _
    $region23: #{tpu_custom_call.1} parent=1 // pred_check_branch
      %65 = sbr.rel (0) target = $region25
    $region24: #{tpu_custom_call.1} parent=1 // pred_region
      %s67 = ssub.s32 4096, 4096
      %68 = vsyncadd [#allocation9], %s67
      %s69 = sshll.u32 [#allocation10], 4
      %s70 = int_to_ptr.vmem [resolvable:$true] %s69
      %75 = dma.hbm_to_vmem [thread:$0]  %s5, 4096, %s70, [#allocation9], 64, 64, 4
    $region25: #{tpu_custom_call.1} parent=1 // pred_fallthru
      _
    // Predicated region
    $region26: #{tpu_custom_call.1} parent=1 // pred_check
      _
    $region27: #{tpu_custom_call.1} parent=1 // pred_check_branch
      %77 = sbr.rel (0) target = $region29
    $region28: #{tpu_custom_call.1} parent=1 // pred_region
      _
    $region29: #{tpu_custom_call.1} parent=1 // pred_fallthru
      _
    // Predicated region
    $region30: #{tpu_custom_call.1} parent=1 // pred_check
      _
    $region31: #{tpu_custom_call.1} parent=1 // pred_check_branch
      %79 = sbr.rel (0) target = $region33
    $region32: #{tpu_custom_call.1} parent=1 // pred_region
      %80 = dma.done [#allocation3], 1792
    $region33: #{tpu_custom_call.1} parent=1 // pred_fallthru
      _
    // Predicated region
    $region34: #{tpu_custom_call.1} parent=1 // pred_check
      _
    $region35: #{tpu_custom_call.1} parent=1 // pred_check_branch
      %82 = sbr.rel (0) target = $region37
    $region36: #{tpu_custom_call.1} parent=1 // pred_region
      %83 = dma.done [#allocation6], 28672
    $region37: #{tpu_custom_call.1} parent=1 // pred_fallthru
      _
    // Predicated region
    $region38: #{tpu_custom_call.1} parent=1 // pred_check
      _
    $region39: #{tpu_custom_call.1} parent=1 // pred_check_branch
      %85 = sbr.rel (0) target = $region41
    $region40: #{tpu_custom_call.1} parent=1 // pred_region
      %86 = dma.done [#allocation6], 64
    $region41: #{tpu_custom_call.1} parent=1 // pred_fallthru
      _
    // Predicated region
    $region42: #{tpu_custom_call.1} parent=1 // pred_check
      _
    $region43: #{tpu_custom_call.1} parent=1 // pred_check_branch
      %88 = sbr.rel (0) target = $region45
    $region44: #{tpu_custom_call.1} parent=1 // pred_region
      %89 = dma.done [#allocation9], 16384
    $region45: #{tpu_custom_call.1} parent=1 // pred_fallthru
      _
    // Predicated region
    $region46: #{tpu_custom_call.1} parent=1 // pred_check
      _
    $region47: #{tpu_custom_call.1} parent=1 // pred_check_branch
      %91 = sbr.rel (0) target = $region49
    $region48: #{tpu_custom_call.1} parent=1 // pred_region
      %92 = dma.done [#allocation9], 4096
    $region49: #{tpu_custom_call.1} parent=1 // pred_fallthru
      _
    %v94 = vld [vmem:[#allocation2] sm:$0xff]
    %v95 = vld [vmem:[#allocation2 + $0x8] sm:$0xff]
    %v96 = vld [vmem:[#allocation2 + $0x10] sm:$0xff]
    %v97 = vld [vmem:[#allocation2 + $0x18] sm:$0xf]
    %v98 = vld [vmem:[#allocation2 + $0x1c] sm:$0xff]
    %v99 = vld [vmem:[#allocation2 + $0x24] sm:$0xff]
    %v100 = vld [vmem:[#allocation2 + $0x2c] sm:$0xff]
    %v101 = vld [vmem:[#allocation2 + $0x34] sm:$0xf]
    %v102 = vld [vmem:[#allocation2 + $0x38] sm:$0xff]
    %v103 = vld [vmem:[#allocation2 + $0x40] sm:$0xff]
    %v104 = vld [vmem:[#allocation2 + $0x48] sm:$0xff]
    %v105 = vld [vmem:[#allocation2 + $0x50] sm:$0xf]
    %v106 = vld [vmem:[#allocation2 + $0x54] sm:$0xff]
    %v107 = vld [vmem:[#allocation2 + $0x5c] sm:$0xff]
    %v108 = vld [vmem:[#allocation2 + $0x64] sm:$0xff]
    %v109 = vld [vmem:[#allocation2 + $0x6c] sm:$0xf]
    %v110 = vld [vmem:[#allocation5] sm:$0xff]
    %v111 = vld [vmem:[#allocation5 + $0x8] sm:$0xff]
    %v112 = vld [vmem:[#allocation5 + $0x10] sm:$0xff]
    %v113 = vld [vmem:[#allocation5 + $0x18] sm:$0xff]
    %v114 = vld [vmem:[#allocation5 + $0x20] sm:$0xff]
    %v115 = vld [vmem:[#allocation5 + $0x28] sm:$0xff]
    %v116 = vld [vmem:[#allocation5 + $0x30] sm:$0xff]
    %v117 = vld [vmem:[#allocation5 + $0x38] sm:$0xff]
    %v118 = vld [vmem:[#allocation5 + $0x40] sm:$0xff]
    %v119 = vld [vmem:[#allocation5 + $0x48] sm:$0xff]
    %v120 = vld [vmem:[#allocation5 + $0x50] sm:$0xff]
    %v121 = vld [vmem:[#allocation5 + $0x58] sm:$0xff]
    %v122 = vld [vmem:[#allocation5 + $0x60] sm:$0xff]
    %v123 = vld [vmem:[#allocation5 + $0x68] sm:$0xff]
    %v124 = vld [vmem:[#allocation5 + $0x70] sm:$0xff]
    %v125 = vld [vmem:[#allocation5 + $0x78] sm:$0xff]
    %v126 = vld [vmem:[#allocation5 + $0x80] sm:$0xff]
    %v127 = vld [vmem:[#allocation5 + $0x88] sm:$0xff]
    %v128 = vld [vmem:[#allocation5 + $0x90] sm:$0xff]
    %v129 = vld [vmem:[#allocation5 + $0x98] sm:$0xff]
    %v130 = vld [vmem:[#allocation5 + $0xa0] sm:$0xff]
    %v131 = vld [vmem:[#allocation5 + $0xa8] sm:$0xff]
    %v132 = vld [vmem:[#allocation5 + $0xb0] sm:$0xff]
    %v133 = vld [vmem:[#allocation5 + $0xb8] sm:$0xff]
    %v134 = vld [vmem:[#allocation5 + $0xc0] sm:$0xff]
    %v135 = vld [vmem:[#allocation5 + $0xc8] sm:$0xff]
    %v136 = vld [vmem:[#allocation5 + $0xd0] sm:$0xff]
    %v137 = vld [vmem:[#allocation5 + $0xd8] sm:$0xff]
    %v138 = vld [vmem:[#allocation5 + $0xe0] sm:$0xff]
    %v139 = vld [vmem:[#allocation5 + $0xe8] sm:$0xff]
    %v140 = vld [vmem:[#allocation5 + $0xf0] sm:$0xff]
    %v141 = vld [vmem:[#allocation5 + $0xf8] sm:$0xff]
    %v142 = vld [vmem:[#allocation5 + $0x100] sm:$0xff]
    %v143 = vld [vmem:[#allocation5 + $0x108] sm:$0xff]
    %v144 = vld [vmem:[#allocation5 + $0x110] sm:$0xff]
    %v145 = vld [vmem:[#allocation5 + $0x118] sm:$0xff]
    %v146 = vld [vmem:[#allocation5 + $0x120] sm:$0xff]
    %v147 = vld [vmem:[#allocation5 + $0x128] sm:$0xff]
    %v148 = vld [vmem:[#allocation5 + $0x130] sm:$0xff]
    %v149 = vld [vmem:[#allocation5 + $0x138] sm:$0xff]
    %v150 = vld [vmem:[#allocation5 + $0x140] sm:$0xff]
    %v151 = vld [vmem:[#allocation5 + $0x148] sm:$0xff]
    %v152 = vld [vmem:[#allocation5 + $0x150] sm:$0xff]
    %v153 = vld [vmem:[#allocation5 + $0x158] sm:$0xff]
    %v154 = vld [vmem:[#allocation5 + $0x160] sm:$0xff]
    %v155 = vld [vmem:[#allocation5 + $0x168] sm:$0xff]
    %v156 = vld [vmem:[#allocation5 + $0x170] sm:$0xff]
    %v157 = vld [vmem:[#allocation5 + $0x178] sm:$0xff]
    %v158 = vld [vmem:[#allocation5 + $0x180] sm:$0xff]
    %v159 = vld [vmem:[#allocation5 + $0x188] sm:$0xff]
    %v160 = vld [vmem:[#allocation5 + $0x190] sm:$0xff]
    %v161 = vld [vmem:[#allocation5 + $0x198] sm:$0xff]
    %v162 = vld [vmem:[#allocation5 + $0x1a0] sm:$0xff]
    %v163 = vld [vmem:[#allocation5 + $0x1a8] sm:$0xff]
    %v164 = vld [vmem:[#allocation5 + $0x1b0] sm:$0xff]
    %v165 = vld [vmem:[#allocation5 + $0x1b8] sm:$0xff]
    %v166 = vld [vmem:[#allocation5 + $0x1c0] sm:$0xff]
    %v167 = vld [vmem:[#allocation5 + $0x1c8] sm:$0xff]
    %v168 = vld [vmem:[#allocation5 + $0x1d0] sm:$0xff]
    %v169 = vld [vmem:[#allocation5 + $0x1d8] sm:$0xff]
    %v170 = vld [vmem:[#allocation5 + $0x1e0] sm:$0xff]
    %v171 = vld [vmem:[#allocation5 + $0x1e8] sm:$0xff]
    %v172 = vld [vmem:[#allocation5 + $0x1f0] sm:$0xff]
    %v173 = vld [vmem:[#allocation5 + $0x1f8] sm:$0xff]
    %v174 = vld [vmem:[#allocation5 + $0x200] sm:$0xff]
    %v175 = vld [vmem:[#allocation5 + $0x208] sm:$0xff]
    %v176 = vld [vmem:[#allocation5 + $0x210] sm:$0xff]
    %v177 = vld [vmem:[#allocation5 + $0x218] sm:$0xff]
    %v178 = vld [vmem:[#allocation5 + $0x220] sm:$0xff]
    %v179 = vld [vmem:[#allocation5 + $0x228] sm:$0xff]
    %v180 = vld [vmem:[#allocation5 + $0x230] sm:$0xff]
    %v181 = vld [vmem:[#allocation5 + $0x238] sm:$0xff]
    %v182 = vld [vmem:[#allocation5 + $0x240] sm:$0xff]
    %v183 = vld [vmem:[#allocation5 + $0x248] sm:$0xff]
    %v184 = vld [vmem:[#allocation5 + $0x250] sm:$0xff]
    %v185 = vld [vmem:[#allocation5 + $0x258] sm:$0xff]
    %v186 = vld [vmem:[#allocation5 + $0x260] sm:$0xff]
    %v187 = vld [vmem:[#allocation5 + $0x268] sm:$0xff]
    %v188 = vld [vmem:[#allocation5 + $0x270] sm:$0xff]
    %v189 = vld [vmem:[#allocation5 + $0x278] sm:$0xff]
    %v190 = vld [vmem:[#allocation5 + $0x280] sm:$0xff]
    %v191 = vld [vmem:[#allocation5 + $0x288] sm:$0xff]
    %v192 = vld [vmem:[#allocation5 + $0x290] sm:$0xff]
    %v193 = vld [vmem:[#allocation5 + $0x298] sm:$0xff]
    %v194 = vld [vmem:[#allocation5 + $0x2a0] sm:$0xff]
    %v195 = vld [vmem:[#allocation5 + $0x2a8] sm:$0xff]
    %v196 = vld [vmem:[#allocation5 + $0x2b0] sm:$0xff]
    %v197 = vld [vmem:[#allocation5 + $0x2b8] sm:$0xff]
    %v198 = vld [vmem:[#allocation5 + $0x2c0] sm:$0xff]
    %v199 = vld [vmem:[#allocation5 + $0x2c8] sm:$0xff]
    %v200 = vld [vmem:[#allocation5 + $0x2d0] sm:$0xff]
    %v201 = vld [vmem:[#allocation5 + $0x2d8] sm:$0xff]
    %v202 = vld [vmem:[#allocation5 + $0x2e0] sm:$0xff]
    %v203 = vld [vmem:[#allocation5 + $0x2e8] sm:$0xff]
    %v204 = vld [vmem:[#allocation5 + $0x2f0] sm:$0xff]
    %v205 = vld [vmem:[#allocation5 + $0x2f8] sm:$0xff]
    %v206 = vld [vmem:[#allocation5 + $0x300] sm:$0xff]
    %v207 = vld [vmem:[#allocation5 + $0x308] sm:$0xff]
    %v208 = vld [vmem:[#allocation5 + $0x310] sm:$0xff]
    %v209 = vld [vmem:[#allocation5 + $0x318] sm:$0xff]
    %v210 = vld [vmem:[#allocation5 + $0x320] sm:$0xff]
    %v211 = vld [vmem:[#allocation5 + $0x328] sm:$0xff]
    %v212 = vld [vmem:[#allocation5 + $0x330] sm:$0xff]
    %v213 = vld [vmem:[#allocation5 + $0x338] sm:$0xff]
    %v214 = vld [vmem:[#allocation5 + $0x340] sm:$0xff]
    %v215 = vld [vmem:[#allocation5 + $0x348] sm:$0xff]
    %v216 = vld [vmem:[#allocation5 + $0x350] sm:$0xff]
    %v217 = vld [vmem:[#allocation5 + $0x358] sm:$0xff]
    %v218 = vld [vmem:[#allocation5 + $0x360] sm:$0xff]
    %v219 = vld [vmem:[#allocation5 + $0x368] sm:$0xff]
    %v220 = vld [vmem:[#allocation5 + $0x370] sm:$0xff]
    %v221 = vld [vmem:[#allocation5 + $0x378] sm:$0xff]
    %v222 = vld [vmem:[#allocation5 + $0x380] sm:$0xff]
    %v223 = vld [vmem:[#allocation5 + $0x388] sm:$0xff]
    %v224 = vld [vmem:[#allocation5 + $0x390] sm:$0xff]
    %v225 = vld [vmem:[#allocation5 + $0x398] sm:$0xff]
    %v226 = vld [vmem:[#allocation5 + $0x3a0] sm:$0xff]
    %v227 = vld [vmem:[#allocation5 + $0x3a8] sm:$0xff]
    %v228 = vld [vmem:[#allocation5 + $0x3b0] sm:$0xff]
    %v229 = vld [vmem:[#allocation5 + $0x3b8] sm:$0xff]
    %v230 = vld [vmem:[#allocation5 + $0x3c0] sm:$0xff]
    %v231 = vld [vmem:[#allocation5 + $0x3c8] sm:$0xff]
    %v232 = vld [vmem:[#allocation5 + $0x3d0] sm:$0xff]
    %v233 = vld [vmem:[#allocation5 + $0x3d8] sm:$0xff]
    %v234 = vld [vmem:[#allocation5 + $0x3e0] sm:$0xff]
    %v235 = vld [vmem:[#allocation5 + $0x3e8] sm:$0xff]
    %v236 = vld [vmem:[#allocation5 + $0x3f0] sm:$0xff]
    %v237 = vld [vmem:[#allocation5 + $0x3f8] sm:$0xff]
    %v238 = vld [vmem:[#allocation5 + $0x400] sm:$0xff]
    %v239 = vld [vmem:[#allocation5 + $0x408] sm:$0xff]
    %v240 = vld [vmem:[#allocation5 + $0x410] sm:$0xff]
    %v241 = vld [vmem:[#allocation5 + $0x418] sm:$0xff]
    %v242 = vld [vmem:[#allocation5 + $0x420] sm:$0xff]
    %v243 = vld [vmem:[#allocation5 + $0x428] sm:$0xff]
    %v244 = vld [vmem:[#allocation5 + $0x430] sm:$0xff]
    %v245 = vld [vmem:[#allocation5 + $0x438] sm:$0xff]
    %v246 = vld [vmem:[#allocation5 + $0x440] sm:$0xff]
    %v247 = vld [vmem:[#allocation5 + $0x448] sm:$0xff]
    %v248 = vld [vmem:[#allocation5 + $0x450] sm:$0xff]
    %v249 = vld [vmem:[#allocation5 + $0x458] sm:$0xff]
    %v250 = vld [vmem:[#allocation5 + $0x460] sm:$0xff]
    %v251 = vld [vmem:[#allocation5 + $0x468] sm:$0xff]
    %v252 = vld [vmem:[#allocation5 + $0x470] sm:$0xff]
    %v253 = vld [vmem:[#allocation5 + $0x478] sm:$0xff]
    %v254 = vld [vmem:[#allocation5 + $0x480] sm:$0xff]
    %v255 = vld [vmem:[#allocation5 + $0x488] sm:$0xff]
    %v256 = vld [vmem:[#allocation5 + $0x490] sm:$0xff]
    %v257 = vld [vmem:[#allocation5 + $0x498] sm:$0xff]
    %v258 = vld [vmem:[#allocation5 + $0x4a0] sm:$0xff]
    %v259 = vld [vmem:[#allocation5 + $0x4a8] sm:$0xff]
    %v260 = vld [vmem:[#allocation5 + $0x4b0] sm:$0xff]
    %v261 = vld [vmem:[#allocation5 + $0x4b8] sm:$0xff]
    %v262 = vld [vmem:[#allocation5 + $0x4c0] sm:$0xff]
    %v263 = vld [vmem:[#allocation5 + $0x4c8] sm:$0xff]
    %v264 = vld [vmem:[#allocation5 + $0x4d0] sm:$0xff]
    %v265 = vld [vmem:[#allocation5 + $0x4d8] sm:$0xff]
    %v266 = vld [vmem:[#allocation5 + $0x4e0] sm:$0xff]
    %v267 = vld [vmem:[#allocation5 + $0x4e8] sm:$0xff]
    %v268 = vld [vmem:[#allocation5 + $0x4f0] sm:$0xff]
    %v269 = vld [vmem:[#allocation5 + $0x4f8] sm:$0xff]
    %v270 = vld [vmem:[#allocation5 + $0x500] sm:$0xff]
    %v271 = vld [vmem:[#allocation5 + $0x508] sm:$0xff]
    %v272 = vld [vmem:[#allocation5 + $0x510] sm:$0xff]
    %v273 = vld [vmem:[#allocation5 + $0x518] sm:$0xff]
    %v274 = vld [vmem:[#allocation5 + $0x520] sm:$0xff]
    %v275 = vld [vmem:[#allocation5 + $0x528] sm:$0xff]
    %v276 = vld [vmem:[#allocation5 + $0x530] sm:$0xff]
    %v277 = vld [vmem:[#allocation5 + $0x538] sm:$0xff]
    %v278 = vld [vmem:[#allocation5 + $0x540] sm:$0xff]
    %v279 = vld [vmem:[#allocation5 + $0x548] sm:$0xff]
    %v280 = vld [vmem:[#allocation5 + $0x550] sm:$0xff]
    %v281 = vld [vmem:[#allocation5 + $0x558] sm:$0xff]
    %v282 = vld [vmem:[#allocation5 + $0x560] sm:$0xff]
    %v283 = vld [vmem:[#allocation5 + $0x568] sm:$0xff]
    %v284 = vld [vmem:[#allocation5 + $0x570] sm:$0xff]
    %v285 = vld [vmem:[#allocation5 + $0x578] sm:$0xff]
    %v286 = vld [vmem:[#allocation5 + $0x580] sm:$0xff]
    %v287 = vld [vmem:[#allocation5 + $0x588] sm:$0xff]
    %v288 = vld [vmem:[#allocation5 + $0x590] sm:$0xff]
    %v289 = vld [vmem:[#allocation5 + $0x598] sm:$0xff]
    %v290 = vld [vmem:[#allocation5 + $0x5a0] sm:$0xff]
    %v291 = vld [vmem:[#allocation5 + $0x5a8] sm:$0xff]
    %v292 = vld [vmem:[#allocation5 + $0x5b0] sm:$0xff]
    %v293 = vld [vmem:[#allocation5 + $0x5b8] sm:$0xff]
    %v294 = vld [vmem:[#allocation5 + $0x5c0] sm:$0xff]
    %v295 = vld [vmem:[#allocation5 + $0x5c8] sm:$0xff]
    %v296 = vld [vmem:[#allocation5 + $0x5d0] sm:$0xff]
    %v297 = vld [vmem:[#allocation5 + $0x5d8] sm:$0xff]
    %v298 = vld [vmem:[#allocation5 + $0x5e0] sm:$0xff]
    %v299 = vld [vmem:[#allocation5 + $0x5e8] sm:$0xff]
    %v300 = vld [vmem:[#allocation5 + $0x5f0] sm:$0xff]
    %v301 = vld [vmem:[#allocation5 + $0x5f8] sm:$0xff]
    %v302 = vld [vmem:[#allocation5 + $0x600] sm:$0xff]
    %v303 = vld [vmem:[#allocation5 + $0x608] sm:$0xff]
    %v304 = vld [vmem:[#allocation5 + $0x610] sm:$0xff]
    %v305 = vld [vmem:[#allocation5 + $0x618] sm:$0xff]
    %v306 = vld [vmem:[#allocation5 + $0x620] sm:$0xff]
    %v307 = vld [vmem:[#allocation5 + $0x628] sm:$0xff]
    %v308 = vld [vmem:[#allocation5 + $0x630] sm:$0xff]
    %v309 = vld [vmem:[#allocation5 + $0x638] sm:$0xff]
    %v310 = vld [vmem:[#allocation5 + $0x640] sm:$0xff]
    %v311 = vld [vmem:[#allocation5 + $0x648] sm:$0xff]
    %v312 = vld [vmem:[#allocation5 + $0x650] sm:$0xff]
    %v313 = vld [vmem:[#allocation5 + $0x658] sm:$0xff]
    %v314 = vld [vmem:[#allocation5 + $0x660] sm:$0xff]
    %v315 = vld [vmem:[#allocation5 + $0x668] sm:$0xff]
    %v316 = vld [vmem:[#allocation5 + $0x670] sm:$0xff]
    %v317 = vld [vmem:[#allocation5 + $0x678] sm:$0xff]
    %v318 = vld [vmem:[#allocation5 + $0x680] sm:$0xff]
    %v319 = vld [vmem:[#allocation5 + $0x688] sm:$0xff]
    %v320 = vld [vmem:[#allocation5 + $0x690] sm:$0xff]
    %v321 = vld [vmem:[#allocation5 + $0x698] sm:$0xff]
    %v322 = vld [vmem:[#allocation5 + $0x6a0] sm:$0xff]
    %v323 = vld [vmem:[#allocation5 + $0x6a8] sm:$0xff]
    %v324 = vld [vmem:[#allocation5 + $0x6b0] sm:$0xff]
    %v325 = vld [vmem:[#allocation5 + $0x6b8] sm:$0xff]
    %v326 = vld [vmem:[#allocation5 + $0x6c0] sm:$0xff]
    %v327 = vld [vmem:[#allocation5 + $0x6c8] sm:$0xff]
    %v328 = vld [vmem:[#allocation5 + $0x6d0] sm:$0xff]
    %v329 = vld [vmem:[#allocation5 + $0x6d8] sm:$0xff]
    %v330 = vld [vmem:[#allocation5 + $0x6e0] sm:$0xff]
    %v331 = vld [vmem:[#allocation5 + $0x6e8] sm:$0xff]
    %v332 = vld [vmem:[#allocation5 + $0x6f0] sm:$0xff]
    %v333 = vld [vmem:[#allocation5 + $0x6f8] sm:$0xff]
    %v334 = vld [vmem:[#allocation7] sm:$0xf]
    %v336 = vlaneseq
    %v337 = vshrl.u32 %v336, 7
    %v338 = vsub.s32 0, %v337
    %v339 = vrot.slane %v334, %v338
    %v340 = vlaneseq
    %v341 = vshrl.u32 %v340, 7
    %v342 = vsub.s32 1, %v341
    %v343 = vrot.slane %v334, %v342
    %v344 = vlaneseq
    %v345 = vshrl.u32 %v344, 7
    %v346 = vsub.s32 2, %v345
    %v347 = vrot.slane %v334, %v346
    %v348 = vlaneseq
    %v349 = vshrl.u32 %v348, 7
    %v350 = vsub.s32 3, %v349
    %v351 = vrot.slane %v334, %v350
    %v372 = vunpack.c.l.b16 %v94
    %v373 = vunpack.c.h.b16 %v94
    %v374 = vunpack.c.l.b16 %v95
    %v375 = vunpack.c.h.b16 %v95
    %v376 = vunpack.c.l.b16 %v96
    %v377 = vunpack.c.h.b16 %v96
    %v378 = vunpack.c.l.b16 %v97
    %v379 = vunpack.c.l.b16 %v98
    %v380 = vunpack.c.h.b16 %v98
    %v381 = vunpack.c.l.b16 %v99
    %v382 = vunpack.c.h.b16 %v99
    %v383 = vunpack.c.l.b16 %v100
    %v384 = vunpack.c.h.b16 %v100
    %v385 = vunpack.c.l.b16 %v101
    %v386 = vunpack.c.l.b16 %v102
    %v387 = vunpack.c.h.b16 %v102
    %v388 = vunpack.c.l.b16 %v103
    %v389 = vunpack.c.h.b16 %v103
    %v390 = vunpack.c.l.b16 %v104
    %v391 = vunpack.c.h.b16 %v104
    %v392 = vunpack.c.l.b16 %v105
    %v393 = vunpack.c.l.b16 %v106
    %v394 = vunpack.c.h.b16 %v106
    %v395 = vunpack.c.l.b16 %v107
    %v396 = vunpack.c.h.b16 %v107
    %v397 = vunpack.c.l.b16 %v108
    %v398 = vunpack.c.h.b16 %v108
    %v399 = vunpack.c.l.b16 %v109
    %v400 = vpack.c.b16 %v379, %v372
    %v401 = vpack.c.b16 %v380, %v373
    %v402 = vpack.c.b16 %v381, %v374
    %v403 = vpack.c.b16 %v382, %v375
    %v404 = vpack.c.b16 %v383, %v376
    %v405 = vpack.c.b16 %v384, %v377
    %v406 = vpack.c.b16 %v385, %v378
    %v407 = vpack.c.b16 %v393, %v386
    %v408 = vpack.c.b16 %v394, %v387
    %v409 = vpack.c.b16 %v395, %v388
    %v410 = vpack.c.b16 %v396, %v389
    %v411 = vpack.c.b16 %v397, %v390
    %v412 = vpack.c.b16 %v398, %v391
    %v413 = vpack.c.b16 %v399, %v392
    %v652 = vunpack.c.l.b16 %v110
    %v653 = vunpack.c.h.b16 %v110
    %v654 = vunpack.c.l.b16 %v111
    %v655 = vunpack.c.h.b16 %v111
    %v656 = vunpack.c.l.b16 %v112
    %v657 = vunpack.c.h.b16 %v112
    %v658 = vunpack.c.l.b16 %v113
    %v659 = vunpack.c.h.b16 %v113
    %v660 = vunpack.c.l.b16 %v114
    %v661 = vunpack.c.h.b16 %v114
    %v662 = vunpack.c.l.b16 %v115
    %v663 = vunpack.c.h.b16 %v115
    %v664 = vunpack.c.l.b16 %v116
    %v665 = vunpack.c.h.b16 %v116
    %v666 = vunpack.c.l.b16 %v117
    %v667 = vunpack.c.h.b16 %v117
    %v668 = vunpack.c.l.b16 %v118
    %v669 = vunpack.c.h.b16 %v118
    %v670 = vunpack.c.l.b16 %v119
    %v671 = vunpack.c.h.b16 %v119
    %v672 = vunpack.c.l.b16 %v120
    %v673 = vunpack.c.h.b16 %v120
    %v674 = vunpack.c.l.b16 %v121
    %v675 = vunpack.c.h.b16 %v121
    %v676 = vunpack.c.l.b16 %v122
    %v677 = vunpack.c.h.b16 %v122
    %v678 = vunpack.c.l.b16 %v123
    %v679 = vunpack.c.h.b16 %v123
    %v680 = vunpack.c.l.b16 %v124
    %v681 = vunpack.c.h.b16 %v124
    %v682 = vunpack.c.l.b16 %v125
    %v683 = vunpack.c.h.b16 %v125
    %v684 = vunpack.c.l.b16 %v126
    %v685 = vunpack.c.h.b16 %v126
    %v686 = vunpack.c.l.b16 %v127
    %v687 = vunpack.c.h.b16 %v127
    %v688 = vunpack.c.l.b16 %v128
    %v689 = vunpack.c.h.b16 %v128
    %v690 = vunpack.c.l.b16 %v129
    %v691 = vunpack.c.h.b16 %v129
    %v692 = vunpack.c.l.b16 %v130
    %v693 = vunpack.c.h.b16 %v130
    %v694 = vunpack.c.l.b16 %v131
    %v695 = vunpack.c.h.b16 %v131
    %v696 = vunpack.c.l.b16 %v132
    %v697 = vunpack.c.h.b16 %v132
    %v698 = vunpack.c.l.b16 %v133
    %v699 = vunpack.c.h.b16 %v133
    %v700 = vunpack.c.l.b16 %v134
    %v701 = vunpack.c.h.b16 %v134
    %v702 = vunpack.c.l.b16 %v135
    %v703 = vunpack.c.h.b16 %v135
    %v704 = vunpack.c.l.b16 %v136
    %v705 = vunpack.c.h.b16 %v136
    %v706 = vunpack.c.l.b16 %v137
    %v707 = vunpack.c.h.b16 %v137
    %v708 = vunpack.c.l.b16 %v138
    %v709 = vunpack.c.h.b16 %v138
    %v710 = vunpack.c.l.b16 %v139
    %v711 = vunpack.c.h.b16 %v139
    %v712 = vunpack.c.l.b16 %v140
    %v713 = vunpack.c.h.b16 %v140
    %v714 = vunpack.c.l.b16 %v141
    %v715 = vunpack.c.h.b16 %v141
    %v716 = vunpack.c.l.b16 %v142
    %v717 = vunpack.c.h.b16 %v142
    %v718 = vunpack.c.l.b16 %v143
    %v719 = vunpack.c.h.b16 %v143
    %v720 = vunpack.c.l.b16 %v144
    %v721 = vunpack.c.h.b16 %v144
    %v722 = vunpack.c.l.b16 %v145
    %v723 = vunpack.c.h.b16 %v145
    %v724 = vunpack.c.l.b16 %v146
    %v725 = vunpack.c.h.b16 %v146
    %v726 = vunpack.c.l.b16 %v147
    %v727 = vunpack.c.h.b16 %v147
    %v728 = vunpack.c.l.b16 %v148
    %v729 = vunpack.c.h.b16 %v148
    %v730 = vunpack.c.l.b16 %v149
    %v731 = vunpack.c.h.b16 %v149
    %v732 = vunpack.c.l.b16 %v150
    %v733 = vunpack.c.h.b16 %v150
    %v734 = vunpack.c.l.b16 %v151
    %v735 = vunpack.c.h.b16 %v151
    %v736 = vunpack.c.l.b16 %v152
    %v737 = vunpack.c.h.b16 %v152
    %v738 = vunpack.c.l.b16 %v153
    %v739 = vunpack.c.h.b16 %v153
    %v740 = vunpack.c.l.b16 %v154
    %v741 = vunpack.c.h.b16 %v154
    %v742 = vunpack.c.l.b16 %v155
    %v743 = vunpack.c.h.b16 %v155
    %v744 = vunpack.c.l.b16 %v156
    %v745 = vunpack.c.h.b16 %v156
    %v746 = vunpack.c.l.b16 %v157
    %v747 = vunpack.c.h.b16 %v157
    %v748 = vunpack.c.l.b16 %v158
    %v749 = vunpack.c.h.b16 %v158
    %v750 = vunpack.c.l.b16 %v159
    %v751 = vunpack.c.h.b16 %v159
    %v752 = vunpack.c.l.b16 %v160
    %v753 = vunpack.c.h.b16 %v160
    %v754 = vunpack.c.l.b16 %v161
    %v755 = vunpack.c.h.b16 %v161
    %v756 = vunpack.c.l.b16 %v162
    %v757 = vunpack.c.h.b16 %v162
    %v758 = vunpack.c.l.b16 %v163
    %v759 = vunpack.c.h.b16 %v163
    %v760 = vunpack.c.l.b16 %v164
    %v761 = vunpack.c.h.b16 %v164
    %v762 = vunpack.c.l.b16 %v165
    %v763 = vunpack.c.h.b16 %v165
    %v764 = vunpack.c.l.b16 %v166
    %v765 = vunpack.c.h.b16 %v166
    %v766 = vunpack.c.l.b16 %v167
    %v767 = vunpack.c.h.b16 %v167
    %v768 = vunpack.c.l.b16 %v168
    %v769 = vunpack.c.h.b16 %v168
    %v770 = vunpack.c.l.b16 %v169
    %v771 = vunpack.c.h.b16 %v169
    %v772 = vunpack.c.l.b16 %v170
    %v773 = vunpack.c.h.b16 %v170
    %v774 = vunpack.c.l.b16 %v171
    %v775 = vunpack.c.h.b16 %v171
    %v776 = vunpack.c.l.b16 %v172
    %v777 = vunpack.c.h.b16 %v172
    %v778 = vunpack.c.l.b16 %v173
    %v779 = vunpack.c.h.b16 %v173
    %v780 = vunpack.c.l.b16 %v174
    %v781 = vunpack.c.h.b16 %v174
    %v782 = vunpack.c.l.b16 %v175
    %v783 = vunpack.c.h.b16 %v175
    %v784 = vunpack.c.l.b16 %v176
    %v785 = vunpack.c.h.b16 %v176
    %v786 = vunpack.c.l.b16 %v177
    %v787 = vunpack.c.h.b16 %v177
    %v788 = vunpack.c.l.b16 %v178
    %v789 = vunpack.c.h.b16 %v178
    %v790 = vunpack.c.l.b16 %v179
    %v791 = vunpack.c.h.b16 %v179
    %v792 = vunpack.c.l.b16 %v180
    %v793 = vunpack.c.h.b16 %v180
    %v794 = vunpack.c.l.b16 %v181
    %v795 = vunpack.c.h.b16 %v181
    %v796 = vunpack.c.l.b16 %v182
    %v797 = vunpack.c.h.b16 %v182
    %v798 = vunpack.c.l.b16 %v183
    %v799 = vunpack.c.h.b16 %v183
    %v800 = vunpack.c.l.b16 %v184
    %v801 = vunpack.c.h.b16 %v184
    %v802 = vunpack.c.l.b16 %v185
    %v803 = vunpack.c.h.b16 %v185
    %v804 = vunpack.c.l.b16 %v186
    %v805 = vunpack.c.h.b16 %v186
    %v806 = vunpack.c.l.b16 %v187
    %v807 = vunpack.c.h.b16 %v187
    %v808 = vunpack.c.l.b16 %v188
    %v809 = vunpack.c.h.b16 %v188
    %v810 = vunpack.c.l.b16 %v189
    %v811 = vunpack.c.h.b16 %v189
    %v812 = vunpack.c.l.b16 %v190
    %v813 = vunpack.c.h.b16 %v190
    %v814 = vunpack.c.l.b16 %v191
    %v815 = vunpack.c.h.b16 %v191
    %v816 = vunpack.c.l.b16 %v192
    %v817 = vunpack.c.h.b16 %v192
    %v818 = vunpack.c.l.b16 %v193
    %v819 = vunpack.c.h.b16 %v193
    %v820 = vunpack.c.l.b16 %v194
    %v821 = vunpack.c.h.b16 %v194
    %v822 = vunpack.c.l.b16 %v195
    %v823 = vunpack.c.h.b16 %v195
    %v824 = vunpack.c.l.b16 %v196
    %v825 = vunpack.c.h.b16 %v196
    %v826 = vunpack.c.l.b16 %v197
    %v827 = vunpack.c.h.b16 %v197
    %v828 = vunpack.c.l.b16 %v198
    %v829 = vunpack.c.h.b16 %v198
    %v830 = vunpack.c.l.b16 %v199
    %v831 = vunpack.c.h.b16 %v199
    %v832 = vunpack.c.l.b16 %v200
    %v833 = vunpack.c.h.b16 %v200
    %v834 = vunpack.c.l.b16 %v201
    %v835 = vunpack.c.h.b16 %v201
    %v836 = vunpack.c.l.b16 %v202
    %v837 = vunpack.c.h.b16 %v202
    %v838 = vunpack.c.l.b16 %v203
    %v839 = vunpack.c.h.b16 %v203
    %v840 = vunpack.c.l.b16 %v204
    %v841 = vunpack.c.h.b16 %v204
    %v842 = vunpack.c.l.b16 %v205
    %v843 = vunpack.c.h.b16 %v205
    %v844 = vunpack.c.l.b16 %v206
    %v845 = vunpack.c.h.b16 %v206
    %v846 = vunpack.c.l.b16 %v207
    %v847 = vunpack.c.h.b16 %v207
    %v848 = vunpack.c.l.b16 %v208
    %v849 = vunpack.c.h.b16 %v208
    %v850 = vunpack.c.l.b16 %v209
    %v851 = vunpack.c.h.b16 %v209
    %v852 = vunpack.c.l.b16 %v210
    %v853 = vunpack.c.h.b16 %v210
    %v854 = vunpack.c.l.b16 %v211
    %v855 = vunpack.c.h.b16 %v211
    %v856 = vunpack.c.l.b16 %v212
    %v857 = vunpack.c.h.b16 %v212
    %v858 = vunpack.c.l.b16 %v213
    %v859 = vunpack.c.h.b16 %v213
    %v860 = vunpack.c.l.b16 %v214
    %v861 = vunpack.c.h.b16 %v214
    %v862 = vunpack.c.l.b16 %v215
    %v863 = vunpack.c.h.b16 %v215
    %v864 = vunpack.c.l.b16 %v216
    %v865 = vunpack.c.h.b16 %v216
    %v866 = vunpack.c.l.b16 %v217
    %v867 = vunpack.c.h.b16 %v217
    %v868 = vunpack.c.l.b16 %v218
    %v869 = vunpack.c.h.b16 %v218
    %v870 = vunpack.c.l.b16 %v219
    %v871 = vunpack.c.h.b16 %v219
    %v872 = vunpack.c.l.b16 %v220
    %v873 = vunpack.c.h.b16 %v220
    %v874 = vunpack.c.l.b16 %v221
    %v875 = vunpack.c.h.b16 %v221
    %v876 = vunpack.c.l.b16 %v222
    %v877 = vunpack.c.h.b16 %v222
    %v878 = vunpack.c.l.b16 %v223
    %v879 = vunpack.c.h.b16 %v223
    %v880 = vunpack.c.l.b16 %v224
    %v881 = vunpack.c.h.b16 %v224
    %v882 = vunpack.c.l.b16 %v225
    %v883 = vunpack.c.h.b16 %v225
    %v884 = vunpack.c.l.b16 %v226
    %v885 = vunpack.c.h.b16 %v226
    %v886 = vunpack.c.l.b16 %v227
    %v887 = vunpack.c.h.b16 %v227
    %v888 = vunpack.c.l.b16 %v228
    %v889 = vunpack.c.h.b16 %v228
    %v890 = vunpack.c.l.b16 %v229
    %v891 = vunpack.c.h.b16 %v229
    %v892 = vunpack.c.l.b16 %v230
    %v893 = vunpack.c.h.b16 %v230
    %v894 = vunpack.c.l.b16 %v231
    %v895 = vunpack.c.h.b16 %v231
    %v896 = vunpack.c.l.b16 %v232
    %v897 = vunpack.c.h.b16 %v232
    %v898 = vunpack.c.l.b16 %v233
    %v899 = vunpack.c.h.b16 %v233
    %v900 = vunpack.c.l.b16 %v234
    %v901 = vunpack.c.h.b16 %v234
    %v902 = vunpack.c.l.b16 %v235
    %v903 = vunpack.c.h.b16 %v235
    %v904 = vunpack.c.l.b16 %v236
    %v905 = vunpack.c.h.b16 %v236
    %v906 = vunpack.c.l.b16 %v237
    %v907 = vunpack.c.h.b16 %v237
    %v908 = vunpack.c.l.b16 %v238
    %v909 = vunpack.c.h.b16 %v238
    %v910 = vunpack.c.l.b16 %v239
    %v911 = vunpack.c.h.b16 %v239
    %v912 = vunpack.c.l.b16 %v240
    %v913 = vunpack.c.h.b16 %v240
    %v914 = vunpack.c.l.b16 %v241
    %v915 = vunpack.c.h.b16 %v241
    %v916 = vunpack.c.l.b16 %v242
    %v917 = vunpack.c.h.b16 %v242
    %v918 = vunpack.c.l.b16 %v243
    %v919 = vunpack.c.h.b16 %v243
    %v920 = vunpack.c.l.b16 %v244
    %v921 = vunpack.c.h.b16 %v244
    %v922 = vunpack.c.l.b16 %v245
    %v923 = vunpack.c.h.b16 %v245
    %v924 = vunpack.c.l.b16 %v246
    %v925 = vunpack.c.h.b16 %v246
    %v926 = vunpack.c.l.b16 %v247
    %v927 = vunpack.c.h.b16 %v247
    %v928 = vunpack.c.l.b16 %v248
    %v929 = vunpack.c.h.b16 %v248
    %v930 = vunpack.c.l.b16 %v249
    %v931 = vunpack.c.h.b16 %v249
    %v932 = vunpack.c.l.b16 %v250
    %v933 = vunpack.c.h.b16 %v250
    %v934 = vunpack.c.l.b16 %v251
    %v935 = vunpack.c.h.b16 %v251
    %v936 = vunpack.c.l.b16 %v252
    %v937 = vunpack.c.h.b16 %v252
    %v938 = vunpack.c.l.b16 %v253
    %v939 = vunpack.c.h.b16 %v253
    %v940 = vunpack.c.l.b16 %v254
    %v941 = vunpack.c.h.b16 %v254
    %v942 = vunpack.c.l.b16 %v255
    %v943 = vunpack.c.h.b16 %v255
    %v944 = vunpack.c.l.b16 %v256
    %v945 = vunpack.c.h.b16 %v256
    %v946 = vunpack.c.l.b16 %v257
    %v947 = vunpack.c.h.b16 %v257
    %v948 = vunpack.c.l.b16 %v258
    %v949 = vunpack.c.h.b16 %v258
    %v950 = vunpack.c.l.b16 %v259
    %v951 = vunpack.c.h.b16 %v259
    %v952 = vunpack.c.l.b16 %v260
    %v953 = vunpack.c.h.b16 %v260
    %v954 = vunpack.c.l.b16 %v261
    %v955 = vunpack.c.h.b16 %v261
    %v956 = vunpack.c.l.b16 %v262
    %v957 = vunpack.c.h.b16 %v262
    %v958 = vunpack.c.l.b16 %v263
    %v959 = vunpack.c.h.b16 %v263
    %v960 = vunpack.c.l.b16 %v264
    %v961 = vunpack.c.h.b16 %v264
    %v962 = vunpack.c.l.b16 %v265
    %v963 = vunpack.c.h.b16 %v265
    %v964 = vunpack.c.l.b16 %v266
    %v965 = vunpack.c.h.b16 %v266
    %v966 = vunpack.c.l.b16 %v267
    %v967 = vunpack.c.h.b16 %v267
    %v968 = vunpack.c.l.b16 %v268
    %v969 = vunpack.c.h.b16 %v268
    %v970 = vunpack.c.l.b16 %v269
    %v971 = vunpack.c.h.b16 %v269
    %v972 = vunpack.c.l.b16 %v270
    %v973 = vunpack.c.h.b16 %v270
    %v974 = vunpack.c.l.b16 %v271
    %v975 = vunpack.c.h.b16 %v271
    %v976 = vunpack.c.l.b16 %v272
    %v977 = vunpack.c.h.b16 %v272
    %v978 = vunpack.c.l.b16 %v273
    %v979 = vunpack.c.h.b16 %v273
    %v980 = vunpack.c.l.b16 %v274
    %v981 = vunpack.c.h.b16 %v274
    %v982 = vunpack.c.l.b16 %v275
    %v983 = vunpack.c.h.b16 %v275
    %v984 = vunpack.c.l.b16 %v276
    %v985 = vunpack.c.h.b16 %v276
    %v986 = vunpack.c.l.b16 %v277
    %v987 = vunpack.c.h.b16 %v277
    %v988 = vunpack.c.l.b16 %v278
    %v989 = vunpack.c.h.b16 %v278
    %v990 = vunpack.c.l.b16 %v279
    %v991 = vunpack.c.h.b16 %v279
    %v992 = vunpack.c.l.b16 %v280
    %v993 = vunpack.c.h.b16 %v280
    %v994 = vunpack.c.l.b16 %v281
    %v995 = vunpack.c.h.b16 %v281
    %v996 = vunpack.c.l.b16 %v282
    %v997 = vunpack.c.h.b16 %v282
    %v998 = vunpack.c.l.b16 %v283
    %v999 = vunpack.c.h.b16 %v283
    %v1000 = vunpack.c.l.b16 %v284
    %v1001 = vunpack.c.h.b16 %v284
    %v1002 = vunpack.c.l.b16 %v285
    %v1003 = vunpack.c.h.b16 %v285
    %v1004 = vunpack.c.l.b16 %v286
    %v1005 = vunpack.c.h.b16 %v286
    %v1006 = vunpack.c.l.b16 %v287
    %v1007 = vunpack.c.h.b16 %v287
    %v1008 = vunpack.c.l.b16 %v288
    %v1009 = vunpack.c.h.b16 %v288
    %v1010 = vunpack.c.l.b16 %v289
    %v1011 = vunpack.c.h.b16 %v289
    %v1012 = vunpack.c.l.b16 %v290
    %v1013 = vunpack.c.h.b16 %v290
    %v1014 = vunpack.c.l.b16 %v291
    %v1015 = vunpack.c.h.b16 %v291
    %v1016 = vunpack.c.l.b16 %v292
    %v1017 = vunpack.c.h.b16 %v292
    %v1018 = vunpack.c.l.b16 %v293
    %v1019 = vunpack.c.h.b16 %v293
    %v1020 = vunpack.c.l.b16 %v294
    %v1021 = vunpack.c.h.b16 %v294
    %v1022 = vunpack.c.l.b16 %v295
    %v1023 = vunpack.c.h.b16 %v295
    %v1024 = vunpack.c.l.b16 %v296
    %v1025 = vunpack.c.h.b16 %v296
    %v1026 = vunpack.c.l.b16 %v297
    %v1027 = vunpack.c.h.b16 %v297
    %v1028 = vunpack.c.l.b16 %v298
    %v1029 = vunpack.c.h.b16 %v298
    %v1030 = vunpack.c.l.b16 %v299
    %v1031 = vunpack.c.h.b16 %v299
    %v1032 = vunpack.c.l.b16 %v300
    %v1033 = vunpack.c.h.b16 %v300
    %v1034 = vunpack.c.l.b16 %v301
    %v1035 = vunpack.c.h.b16 %v301
    %v1036 = vunpack.c.l.b16 %v302
    %v1037 = vunpack.c.h.b16 %v302
    %v1038 = vunpack.c.l.b16 %v303
    %v1039 = vunpack.c.h.b16 %v303
    %v1040 = vunpack.c.l.b16 %v304
    %v1041 = vunpack.c.h.b16 %v304
    %v1042 = vunpack.c.l.b16 %v305
    %v1043 = vunpack.c.h.b16 %v305
    %v1044 = vunpack.c.l.b16 %v306
    %v1045 = vunpack.c.h.b16 %v306
    %v1046 = vunpack.c.l.b16 %v307
    %v1047 = vunpack.c.h.b16 %v307
    %v1048 = vunpack.c.l.b16 %v308
    %v1049 = vunpack.c.h.b16 %v308
    %v1050 = vunpack.c.l.b16 %v309
    %v1051 = vunpack.c.h.b16 %v309
    %v1052 = vunpack.c.l.b16 %v310
    %v1053 = vunpack.c.h.b16 %v310
    %v1054 = vunpack.c.l.b16 %v311
    %v1055 = vunpack.c.h.b16 %v311
    %v1056 = vunpack.c.l.b16 %v312
    %v1057 = vunpack.c.h.b16 %v312
    %v1058 = vunpack.c.l.b16 %v313
    %v1059 = vunpack.c.h.b16 %v313
    %v1060 = vunpack.c.l.b16 %v314
    %v1061 = vunpack.c.h.b16 %v314
    %v1062 = vunpack.c.l.b16 %v315
    %v1063 = vunpack.c.h.b16 %v315
    %v1064 = vunpack.c.l.b16 %v316
    %v1065 = vunpack.c.h.b16 %v316
    %v1066 = vunpack.c.l.b16 %v317
    %v1067 = vunpack.c.h.b16 %v317
    %v1068 = vunpack.c.l.b16 %v318
    %v1069 = vunpack.c.h.b16 %v318
    %v1070 = vunpack.c.l.b16 %v319
    %v1071 = vunpack.c.h.b16 %v319
    %v1072 = vunpack.c.l.b16 %v320
    %v1073 = vunpack.c.h.b16 %v320
    %v1074 = vunpack.c.l.b16 %v321
    %v1075 = vunpack.c.h.b16 %v321
    %v1076 = vunpack.c.l.b16 %v322
    %v1077 = vunpack.c.h.b16 %v322
    %v1078 = vunpack.c.l.b16 %v323
    %v1079 = vunpack.c.h.b16 %v323
    %v1080 = vunpack.c.l.b16 %v324
    %v1081 = vunpack.c.h.b16 %v324
    %v1082 = vunpack.c.l.b16 %v325
    %v1083 = vunpack.c.h.b16 %v325
    %v1084 = vunpack.c.l.b16 %v326
    %v1085 = vunpack.c.h.b16 %v326
    %v1086 = vunpack.c.l.b16 %v327
    %v1087 = vunpack.c.h.b16 %v327
    %v1088 = vunpack.c.l.b16 %v328
    %v1089 = vunpack.c.h.b16 %v328
    %v1090 = vunpack.c.l.b16 %v329
    %v1091 = vunpack.c.h.b16 %v329
    %v1092 = vunpack.c.l.b16 %v330
    %v1093 = vunpack.c.h.b16 %v330
    %v1094 = vunpack.c.l.b16 %v331
    %v1095 = vunpack.c.h.b16 %v331
    %v1096 = vunpack.c.l.b16 %v332
    %v1097 = vunpack.c.h.b16 %v332
    %v1098 = vunpack.c.l.b16 %v333
    %v1099 = vunpack.c.h.b16 %v333
    %v1100 = vpack.c.b16 %v656, %v652
    %v1101 = vpack.c.b16 %v657, %v653
    %v1102 = vpack.c.b16 %v658, %v654
    %v1103 = vpack.c.b16 %v659, %v655
    %v1104 = vpack.c.b16 %v664, %v660
    %v1105 = vpack.c.b16 %v665, %v661
    %v1106 = vpack.c.b16 %v666, %v662
    %v1107 = vpack.c.b16 %v667, %v663
    %v1108 = vpack.c.b16 %v672, %v668
    %v1109 = vpack.c.b16 %v673, %v669
    %v1110 = vpack.c.b16 %v674, %v670
    %v1111 = vpack.c.b16 %v675, %v671
    %v1112 = vpack.c.b16 %v680, %v676
    %v1113 = vpack.c.b16 %v681, %v677
    %v1114 = vpack.c.b16 %v682, %v678
    %v1115 = vpack.c.b16 %v683, %v679
    %v1116 = vpack.c.b16 %v688, %v684
    %v1117 = vpack.c.b16 %v689, %v685
    %v1118 = vpack.c.b16 %v690, %v686
    %v1119 = vpack.c.b16 %v691, %v687
    %v1120 = vpack.c.b16 %v696, %v692
    %v1121 = vpack.c.b16 %v697, %v693
    %v1122 = vpack.c.b16 %v698, %v694
    %v1123 = vpack.c.b16 %v699, %v695
    %v1124 = vpack.c.b16 %v704, %v700
    %v1125 = vpack.c.b16 %v705, %v701
    %v1126 = vpack.c.b16 %v706, %v702
    %v1127 = vpack.c.b16 %v707, %v703
    %v1128 = vpack.c.b16 %v712, %v708
    %v1129 = vpack.c.b16 %v713, %v709
    %v1130 = vpack.c.b16 %v714, %v710
    %v1131 = vpack.c.b16 %v715, %v711
    %v1132 = vpack.c.b16 %v720, %v716
    %v1133 = vpack.c.b16 %v721, %v717
    %v1134 = vpack.c.b16 %v722, %v718
    %v1135 = vpack.c.b16 %v723, %v719
    %v1136 = vpack.c.b16 %v728, %v724
    %v1137 = vpack.c.b16 %v729, %v725
    %v1138 = vpack.c.b16 %v730, %v726
    %v1139 = vpack.c.b16 %v731, %v727
    %v1140 = vpack.c.b16 %v736, %v732
    %v1141 = vpack.c.b16 %v737, %v733
    %v1142 = vpack.c.b16 %v738, %v734
    %v1143 = vpack.c.b16 %v739, %v735
    %v1144 = vpack.c.b16 %v744, %v740
    %v1145 = vpack.c.b16 %v745, %v741
    %v1146 = vpack.c.b16 %v746, %v742
    %v1147 = vpack.c.b16 %v747, %v743
    %v1148 = vpack.c.b16 %v752, %v748
    %v1149 = vpack.c.b16 %v753, %v749
    %v1150 = vpack.c.b16 %v754, %v750
    %v1151 = vpack.c.b16 %v755, %v751
    %v1152 = vpack.c.b16 %v760, %v756
    %v1153 = vpack.c.b16 %v761, %v757
    %v1154 = vpack.c.b16 %v762, %v758
    %v1155 = vpack.c.b16 %v763, %v759
    %v1156 = vpack.c.b16 %v768, %v764
    %v1157 = vpack.c.b16 %v769, %v765
    %v1158 = vpack.c.b16 %v770, %v766
    %v1159 = vpack.c.b16 %v771, %v767
    %v1160 = vpack.c.b16 %v776, %v772
    %v1161 = vpack.c.b16 %v777, %v773
    %v1162 = vpack.c.b16 %v778, %v774
    %v1163 = vpack.c.b16 %v779, %v775
    %v1164 = vpack.c.b16 %v784, %v780
    %v1165 = vpack.c.b16 %v785, %v781
    %v1166 = vpack.c.b16 %v786, %v782
    %v1167 = vpack.c.b16 %v787, %v783
    %v1168 = vpack.c.b16 %v792, %v788
    %v1169 = vpack.c.b16 %v793, %v789
    %v1170 = vpack.c.b16 %v794, %v790
    %v1171 = vpack.c.b16 %v795, %v791
    %v1172 = vpack.c.b16 %v800, %v796
    %v1173 = vpack.c.b16 %v801, %v797
    %v1174 = vpack.c.b16 %v802, %v798
    %v1175 = vpack.c.b16 %v803, %v799
    %v1176 = vpack.c.b16 %v808, %v804
    %v1177 = vpack.c.b16 %v809, %v805
    %v1178 = vpack.c.b16 %v810, %v806
    %v1179 = vpack.c.b16 %v811, %v807
    %v1180 = vpack.c.b16 %v816, %v812
    %v1181 = vpack.c.b16 %v817, %v813
    %v1182 = vpack.c.b16 %v818, %v814
    %v1183 = vpack.c.b16 %v819, %v815
    %v1184 = vpack.c.b16 %v824, %v820
    %v1185 = vpack.c.b16 %v825, %v821
    %v1186 = vpack.c.b16 %v826, %v822
    %v1187 = vpack.c.b16 %v827, %v823
    %v1188 = vpack.c.b16 %v832, %v828
    %v1189 = vpack.c.b16 %v833, %v829
    %v1190 = vpack.c.b16 %v834, %v830
    %v1191 = vpack.c.b16 %v835, %v831
    %v1192 = vpack.c.b16 %v840, %v836
    %v1193 = vpack.c.b16 %v841, %v837
    %v1194 = vpack.c.b16 %v842, %v838
    %v1195 = vpack.c.b16 %v843, %v839
    %v1196 = vpack.c.b16 %v848, %v844
    %v1197 = vpack.c.b16 %v849, %v845
    %v1198 = vpack.c.b16 %v850, %v846
    %v1199 = vpack.c.b16 %v851, %v847
    %v1200 = vpack.c.b16 %v856, %v852
    %v1201 = vpack.c.b16 %v857, %v853
    %v1202 = vpack.c.b16 %v858, %v854
    %v1203 = vpack.c.b16 %v859, %v855
    %v1204 = vpack.c.b16 %v864, %v860
    %v1205 = vpack.c.b16 %v865, %v861
    %v1206 = vpack.c.b16 %v866, %v862
    %v1207 = vpack.c.b16 %v867, %v863
    %v1208 = vpack.c.b16 %v872, %v868
    %v1209 = vpack.c.b16 %v873, %v869
    %v1210 = vpack.c.b16 %v874, %v870
    %v1211 = vpack.c.b16 %v875, %v871
    %v1212 = vpack.c.b16 %v880, %v876
    %v1213 = vpack.c.b16 %v881, %v877
    %v1214 = vpack.c.b16 %v882, %v878
    %v1215 = vpack.c.b16 %v883, %v879
    %v1216 = vpack.c.b16 %v888, %v884
    %v1217 = vpack.c.b16 %v889, %v885
    %v1218 = vpack.c.b16 %v890, %v886
    %v1219 = vpack.c.b16 %v891, %v887
    %v1220 = vpack.c.b16 %v896, %v892
    %v1221 = vpack.c.b16 %v897, %v893
    %v1222 = vpack.c.b16 %v898, %v894
    %v1223 = vpack.c.b16 %v899, %v895
    %v1224 = vpack.c.b16 %v904, %v900
    %v1225 = vpack.c.b16 %v905, %v901
    %v1226 = vpack.c.b16 %v906, %v902
    %v1227 = vpack.c.b16 %v907, %v903
    %v1228 = vpack.c.b16 %v912, %v908
    %v1229 = vpack.c.b16 %v913, %v909
    %v1230 = vpack.c.b16 %v914, %v910
    %v1231 = vpack.c.b16 %v915, %v911
    %v1232 = vpack.c.b16 %v920, %v916
    %v1233 = vpack.c.b16 %v921, %v917
    %v1234 = vpack.c.b16 %v922, %v918
    %v1235 = vpack.c.b16 %v923, %v919
    %v1236 = vpack.c.b16 %v928, %v924
    %v1237 = vpack.c.b16 %v929, %v925
    %v1238 = vpack.c.b16 %v930, %v926
    %v1239 = vpack.c.b16 %v931, %v927
    %v1240 = vpack.c.b16 %v936, %v932
    %v1241 = vpack.c.b16 %v937, %v933
    %v1242 = vpack.c.b16 %v938, %v934
    %v1243 = vpack.c.b16 %v939, %v935
    %v1244 = vpack.c.b16 %v944, %v940
    %v1245 = vpack.c.b16 %v945, %v941
    %v1246 = vpack.c.b16 %v946, %v942
    %v1247 = vpack.c.b16 %v947, %v943
    %v1248 = vpack.c.b16 %v952, %v948
    %v1249 = vpack.c.b16 %v953, %v949
    %v1250 = vpack.c.b16 %v954, %v950
    %v1251 = vpack.c.b16 %v955, %v951
    %v1252 = vpack.c.b16 %v960, %v956
    %v1253 = vpack.c.b16 %v961, %v957
    %v1254 = vpack.c.b16 %v962, %v958
    %v1255 = vpack.c.b16 %v963, %v959
    %v1256 = vpack.c.b16 %v968, %v964
    %v1257 = vpack.c.b16 %v969, %v965
    %v1258 = vpack.c.b16 %v970, %v966
    %v1259 = vpack.c.b16 %v971, %v967
    %v1260 = vpack.c.b16 %v976, %v972
    %v1261 = vpack.c.b16 %v977, %v973
    %v1262 = vpack.c.b16 %v978, %v974
    %v1263 = vpack.c.b16 %v979, %v975
    %v1264 = vpack.c.b16 %v984, %v980
    %v1265 = vpack.c.b16 %v985, %v981
    %v1266 = vpack.c.b16 %v986, %v982
    %v1267 = vpack.c.b16 %v987, %v983
    %v1268 = vpack.c.b16 %v992, %v988
    %v1269 = vpack.c.b16 %v993, %v989
    %v1270 = vpack.c.b16 %v994, %v990
    %v1271 = vpack.c.b16 %v995, %v991
    %v1272 = vpack.c.b16 %v1000, %v996
    %v1273 = vpack.c.b16 %v1001, %v997
    %v1274 = vpack.c.b16 %v1002, %v998
    %v1275 = vpack.c.b16 %v1003, %v999
    %v1276 = vpack.c.b16 %v1008, %v1004
    %v1277 = vpack.c.b16 %v1009, %v1005
    %v1278 = vpack.c.b16 %v1010, %v1006
    %v1279 = vpack.c.b16 %v1011, %v1007
    %v1280 = vpack.c.b16 %v1016, %v1012
    %v1281 = vpack.c.b16 %v1017, %v1013
    %v1282 = vpack.c.b16 %v1018, %v1014
    %v1283 = vpack.c.b16 %v1019, %v1015
    %v1284 = vpack.c.b16 %v1024, %v1020
    %v1285 = vpack.c.b16 %v1025, %v1021
    %v1286 = vpack.c.b16 %v1026, %v1022
    %v1287 = vpack.c.b16 %v1027, %v1023
    %v1288 = vpack.c.b16 %v1032, %v1028
    %v1289 = vpack.c.b16 %v1033, %v1029
    %v1290 = vpack.c.b16 %v1034, %v1030
    %v1291 = vpack.c.b16 %v1035, %v1031
    %v1292 = vpack.c.b16 %v1040, %v1036
    %v1293 = vpack.c.b16 %v1041, %v1037
    %v1294 = vpack.c.b16 %v1042, %v1038
    %v1295 = vpack.c.b16 %v1043, %v1039
    %v1296 = vpack.c.b16 %v1048, %v1044
    %v1297 = vpack.c.b16 %v1049, %v1045
    %v1298 = vpack.c.b16 %v1050, %v1046
    %v1299 = vpack.c.b16 %v1051, %v1047
    %v1300 = vpack.c.b16 %v1056, %v1052
    %v1301 = vpack.c.b16 %v1057, %v1053
    %v1302 = vpack.c.b16 %v1058, %v1054
    %v1303 = vpack.c.b16 %v1059, %v1055
    %v1304 = vpack.c.b16 %v1064, %v1060
    %v1305 = vpack.c.b16 %v1065, %v1061
    %v1306 = vpack.c.b16 %v1066, %v1062
    %v1307 = vpack.c.b16 %v1067, %v1063
    %v1308 = vpack.c.b16 %v1072, %v1068
    %v1309 = vpack.c.b16 %v1073, %v1069
    %v1310 = vpack.c.b16 %v1074, %v1070
    %v1311 = vpack.c.b16 %v1075, %v1071
    %v1312 = vpack.c.b16 %v1080, %v1076
    %v1313 = vpack.c.b16 %v1081, %v1077
    %v1314 = vpack.c.b16 %v1082, %v1078
    %v1315 = vpack.c.b16 %v1083, %v1079
    %v1316 = vpack.c.b16 %v1088, %v1084
    %v1317 = vpack.c.b16 %v1089, %v1085
    %v1318 = vpack.c.b16 %v1090, %v1086
    %v1319 = vpack.c.b16 %v1091, %v1087
    %v1320 = vpack.c.b16 %v1096, %v1092
    %v1321 = vpack.c.b16 %v1097, %v1093
    %v1322 = vpack.c.b16 %v1098, %v1094
    %v1323 = vpack.c.b16 %v1099, %v1095
    %1548 = vmatprep.subr.bf16.mxu0 %v1129
    %1549 = vmatpush1.bf16.msra.mxu0 %v1128
    %1550 = vmatprep.subr.bf16.mxu0 %v1125
    %1551 = vmatpush1.bf16.msra.mxu0 %v1124
    %1552 = vmatprep.subr.bf16.mxu0 %v1121
    %1553 = vmatpush1.bf16.msra.mxu0 %v1120
    %1554 = vmatprep.subr.bf16.mxu0 %v1117
    %1555 = vmatpush1.bf16.msra.mxu0 %v1116
    %1556 = vmatprep.subr.bf16.mxu0 %v1113
    %1557 = vmatpush1.bf16.msra.mxu0 %v1112
    %1558 = vmatprep.subr.bf16.mxu0 %v1109
    %1559 = vmatpush1.bf16.msra.mxu0 %v1108
    %1560 = vmatprep.subr.bf16.mxu0 %v1105
    %1561 = vmatpush1.bf16.msra.mxu0 %v1104
    %1562 = vmatprep.subr.bf16.mxu0 %v1101
    %1563 = vmatpush1.bf16.msra.mxu0 %v1100
    %1564 = vmatprep.subr.bf16.mxu0 %v1161
    %1565 = vmatpush2.bf16.msra.mxu0 %v1160
    %1566 = vmatprep.subr.bf16.mxu0 %v1157
    %1567 = vmatpush2.bf16.msra.mxu0 %v1156
    %1568 = vmatprep.subr.bf16.mxu0 %v1153
    %1569 = vmatpush2.bf16.msra.mxu0 %v1152
    %1570 = vmatprep.subr.bf16.mxu0 %v1149
    %1571 = vmatpush2.bf16.msra.mxu0 %v1148
    %1572 = vmatprep.subr.bf16.mxu0 %v1145
    %1573 = vmatpush2.bf16.msra.mxu0 %v1144
    %1574 = vmatprep.subr.bf16.mxu0 %v1141
    %1575 = vmatpush2.bf16.msra.mxu0 %v1140
    %1576 = vmatprep.subr.bf16.mxu0 %v1137
    %1577 = vmatpush2.bf16.msra.mxu0 %v1136
    %1578 = vmatprep.subr.bf16.mxu0 %v1133
    %1579 = vmatpush2.bf16.msra.mxu0 %v1132
    %1580 = vmatprep.mubr.bf16.mxu0 %v401
    %1581 = vmatmul.mubr.bf16.gmra.mxu0 %v400
    %v1582 = vpop.f32.mrf.mxu0
    %v1583 = vadd.f32 %v339, %v1582
    %v1584 = vpop.f32.mrf.mxu0
    %v1585 = vadd.f32 %v343, %v1584
    %v1586 = vpop.f32.mrf.mxu0
    %v1587 = vadd.f32 %v339, %v1586
    %v1588 = vpop.f32.mrf.mxu0
    %v1589 = vadd.f32 %v343, %v1588
    %1590 = vmatprep.mubr.bf16.mxu0 %v408
    %1591 = vmatmul.mubr.bf16.gmra.mxu0 %v407
    %v1592 = vpop.f32.mrf.mxu0
    %v1593 = vadd.f32 %v339, %v1592
    %v1594 = vpop.f32.mrf.mxu0
    %v1595 = vadd.f32 %v343, %v1594
    %v1596 = vpop.f32.mrf.mxu0
    %v1597 = vadd.f32 %v339, %v1596
    %v1598 = vpop.f32.mrf.mxu0
    %v1599 = vadd.f32 %v343, %v1598
    %1600 = vdwg.mxu0
    %1601 = vmatprep.subr.bf16.mxu0 %v1193
    %1602 = vmatpush1.bf16.msra.mxu0 %v1192
    %1603 = vmatprep.subr.bf16.mxu0 %v1189
    %1604 = vmatpush1.bf16.msra.mxu0 %v1188
    %1605 = vmatprep.subr.bf16.mxu0 %v1185
    %1606 = vmatpush1.bf16.msra.mxu0 %v1184
    %1607 = vmatprep.subr.bf16.mxu0 %v1181
    %1608 = vmatpush1.bf16.msra.mxu0 %v1180
    %1609 = vmatprep.subr.bf16.mxu0 %v1177
    %1610 = vmatpush1.bf16.msra.mxu0 %v1176
    %1611 = vmatprep.subr.bf16.mxu0 %v1173
    %1612 = vmatpush1.bf16.msra.mxu0 %v1172
    %1613 = vmatprep.subr.bf16.mxu0 %v1169
    %1614 = vmatpush1.bf16.msra.mxu0 %v1168
    %1615 = vmatprep.subr.bf16.mxu0 %v1165
    %1616 = vmatpush1.bf16.msra.mxu0 %v1164
    %1617 = vmatprep.subr.bf16.mxu0 %v1225
    %1618 = vmatpush2.bf16.msra.mxu0 %v1224
    %1619 = vmatprep.subr.bf16.mxu0 %v1221
    %1620 = vmatpush2.bf16.msra.mxu0 %v1220
    %1621 = vmatprep.subr.bf16.mxu0 %v1217
    %1622 = vmatpush2.bf16.msra.mxu0 %v1216
    %1623 = vmatprep.subr.bf16.mxu0 %v1213
    %1624 = vmatpush2.bf16.msra.mxu0 %v1212
    %1625 = vmatprep.subr.bf16.mxu0 %v1209
    %1626 = vmatpush2.bf16.msra.mxu0 %v1208
    %1627 = vmatprep.subr.bf16.mxu0 %v1205
    %1628 = vmatpush2.bf16.msra.mxu0 %v1204
    %1629 = vmatprep.subr.bf16.mxu0 %v1201
    %1630 = vmatpush2.bf16.msra.mxu0 %v1200
    %1631 = vmatprep.subr.bf16.mxu0 %v1197
    %1632 = vmatpush2.bf16.msra.mxu0 %v1196
    %1633 = vmatprep.mubr.bf16.mxu0 %v403
    %1634 = vmatmul.mubr.bf16.gmra.mxu0 %v402
    %v1635 = vpop.f32.mrf.mxu0
    %v1636 = vadd.f32 %v1583, %v1635
    %v1637 = vpop.f32.mrf.mxu0
    %v1638 = vadd.f32 %v1585, %v1637
    %v1639 = vpop.f32.mrf.mxu0
    %v1640 = vadd.f32 %v1587, %v1639
    %v1641 = vpop.f32.mrf.mxu0
    %v1642 = vadd.f32 %v1589, %v1641
    %1643 = vmatprep.mubr.bf16.mxu0 %v410
    %1644 = vmatmul.mubr.bf16.gmra.mxu0 %v409
    %v1645 = vpop.f32.mrf.mxu0
    %v1646 = vadd.f32 %v1593, %v1645
    %v1647 = vpop.f32.mrf.mxu0
    %v1648 = vadd.f32 %v1595, %v1647
    %v1649 = vpop.f32.mrf.mxu0
    %v1650 = vadd.f32 %v1597, %v1649
    %v1651 = vpop.f32.mrf.mxu0
    %v1652 = vadd.f32 %v1599, %v1651
    %1653 = vdwg.mxu0
    %1654 = vmatprep.subr.bf16.mxu0 %v1257
    %1655 = vmatpush1.bf16.msra.mxu0 %v1256
    %1656 = vmatprep.subr.bf16.mxu0 %v1253
    %1657 = vmatpush1.bf16.msra.mxu0 %v1252
    %1658 = vmatprep.subr.bf16.mxu0 %v1249
    %1659 = vmatpush1.bf16.msra.mxu0 %v1248
    %1660 = vmatprep.subr.bf16.mxu0 %v1245
    %1661 = vmatpush1.bf16.msra.mxu0 %v1244
    %1662 = vmatprep.subr.bf16.mxu0 %v1241
    %1663 = vmatpush1.bf16.msra.mxu0 %v1240
    %1664 = vmatprep.subr.bf16.mxu0 %v1237
    %1665 = vmatpush1.bf16.msra.mxu0 %v1236
    %1666 = vmatprep.subr.bf16.mxu0 %v1233
    %1667 = vmatpush1.bf16.msra.mxu0 %v1232
    %1668 = vmatprep.subr.bf16.mxu0 %v1229
    %1669 = vmatpush1.bf16.msra.mxu0 %v1228
    %1670 = vmatprep.subr.bf16.mxu0 %v1289
    %1671 = vmatpush2.bf16.msra.mxu0 %v1288
    %1672 = vmatprep.subr.bf16.mxu0 %v1285
    %1673 = vmatpush2.bf16.msra.mxu0 %v1284
    %1674 = vmatprep.subr.bf16.mxu0 %v1281
    %1675 = vmatpush2.bf16.msra.mxu0 %v1280
    %1676 = vmatprep.subr.bf16.mxu0 %v1277
    %1677 = vmatpush2.bf16.msra.mxu0 %v1276
    %1678 = vmatprep.subr.bf16.mxu0 %v1273
    %1679 = vmatpush2.bf16.msra.mxu0 %v1272
    %1680 = vmatprep.subr.bf16.mxu0 %v1269
    %1681 = vmatpush2.bf16.msra.mxu0 %v1268
    %1682 = vmatprep.subr.bf16.mxu0 %v1265
    %1683 = vmatpush2.bf16.msra.mxu0 %v1264
    %1684 = vmatprep.subr.bf16.mxu0 %v1261
    %1685 = vmatpush2.bf16.msra.mxu0 %v1260
    %1686 = vmatprep.mubr.bf16.mxu0 %v405
    %1687 = vmatmul.mubr.bf16.gmra.mxu0 %v404
    %v1688 = vpop.f32.mrf.mxu0
    %v1689 = vadd.f32 %v1636, %v1688
    %v1690 = vpop.f32.mrf.mxu0
    %v1691 = vadd.f32 %v1638, %v1690
    %v1692 = vpop.f32.mrf.mxu0
    %v1693 = vadd.f32 %v1640, %v1692
    %v1694 = vpop.f32.mrf.mxu0
    %v1695 = vadd.f32 %v1642, %v1694
    %1696 = vmatprep.mubr.bf16.mxu0 %v412
    %1697 = vmatmul.mubr.bf16.gmra.mxu0 %v411
    %v1698 = vpop.f32.mrf.mxu0
    %v1699 = vadd.f32 %v1646, %v1698
    %v1700 = vpop.f32.mrf.mxu0
    %v1701 = vadd.f32 %v1648, %v1700
    %v1702 = vpop.f32.mrf.mxu0
    %v1703 = vadd.f32 %v1650, %v1702
    %v1704 = vpop.f32.mrf.mxu0
    %v1705 = vadd.f32 %v1652, %v1704
    %1706 = vdwg.mxu0
    %1707 = vmatprep.subr.bf16.mxu0 %v1321
    %1708 = vmatpush1.bf16.msra.mxu0 %v1320
    %1709 = vmatprep.subr.bf16.mxu0 %v1317
    %1710 = vmatpush1.bf16.msra.mxu0 %v1316
    %1711 = vmatprep.subr.bf16.mxu0 %v1313
    %1712 = vmatpush1.bf16.msra.mxu0 %v1312
    %1713 = vmatprep.subr.bf16.mxu0 %v1309
    %1714 = vmatpush1.bf16.msra.mxu0 %v1308
    %1715 = vmatprep.subr.bf16.mxu0 %v1305
    %1716 = vmatpush1.bf16.msra.mxu0 %v1304
    %1717 = vmatprep.subr.bf16.mxu0 %v1301
    %1718 = vmatpush1.bf16.msra.mxu0 %v1300
    %1719 = vmatprep.subr.bf16.mxu0 %v1297
    %1720 = vmatpush1.bf16.msra.mxu0 %v1296
    %1721 = vmatprep.subr.bf16.mxu0 %v1293
    %1722 = vmatpush1.bf16.msra.mxu0 %v1292
    %1723 = vmatprep.subr.bf16.mxu0 0
    %1724 = vmatpush2.bf16.msra.mxu0 0
    %1725 = vmatprep.subr.bf16.mxu0 0
    %1726 = vmatpush2.bf16.msra.mxu0 0
    %1727 = vmatprep.subr.bf16.mxu0 0
    %1728 = vmatpush2.bf16.msra.mxu0 0
    %1729 = vmatprep.subr.bf16.mxu0 0
    %1730 = vmatpush2.bf16.msra.mxu0 0
    %1731 = vmatprep.subr.bf16.mxu0 0
    %1732 = vmatpush2.bf16.msra.mxu0 0
    %1733 = vmatprep.subr.bf16.mxu0 0
    %1734 = vmatpush2.bf16.msra.mxu0 0
    %1735 = vmatprep.subr.bf16.mxu0 0
    %1736 = vmatpush2.bf16.msra.mxu0 0
    %1737 = vmatprep.subr.bf16.mxu0 0
    %1738 = vmatpush2.bf16.msra.mxu0 0
    %1739 = vmatprep.mubr.bf16.mxu0 0
    %1740 = vmatmul.mubr.bf16.gmra.mxu0 %v406
    %v1741 = vpop.f32.mrf.mxu0
    %v1742 = vadd.f32 %v1689, %v1741
    %v1743 = vpop.f32.mrf.mxu0
    %v1744 = vadd.f32 %v1691, %v1743
    %v1745 = vpop.f32.mrf.mxu0
    %v1746 = vadd.f32 %v1693, %v1745
    %v1747 = vpop.f32.mrf.mxu0
    %v1748 = vadd.f32 %v1695, %v1747
    %1749 = vmatprep.mubr.bf16.mxu0 0
    %1750 = vmatmul.mubr.bf16.gmra.mxu0 %v413
    %v1751 = vpop.f32.mrf.mxu0
    %v1752 = vadd.f32 %v1699, %v1751
    %v1753 = vpop.f32.mrf.mxu0
    %v1754 = vadd.f32 %v1701, %v1753
    %v1755 = vpop.f32.mrf.mxu0
    %v1756 = vadd.f32 %v1703, %v1755
    %v1757 = vpop.f32.mrf.mxu0
    %v1758 = vadd.f32 %v1705, %v1757
    %1759 = vdwg.mxu0
    %1760 = vmatprep.subr.bf16.mxu0 %v1131
    %1761 = vmatpush1.bf16.msra.mxu0 %v1130
    %1762 = vmatprep.subr.bf16.mxu0 %v1127
    %1763 = vmatpush1.bf16.msra.mxu0 %v1126
    %1764 = vmatprep.subr.bf16.mxu0 %v1123
    %1765 = vmatpush1.bf16.msra.mxu0 %v1122
    %1766 = vmatprep.subr.bf16.mxu0 %v1119
    %1767 = vmatpush1.bf16.msra.mxu0 %v1118
    %1768 = vmatprep.subr.bf16.mxu0 %v1115
    %1769 = vmatpush1.bf16.msra.mxu0 %v1114
    %1770 = vmatprep.subr.bf16.mxu0 %v1111
    %1771 = vmatpush1.bf16.msra.mxu0 %v1110
    %1772 = vmatprep.subr.bf16.mxu0 %v1107
    %1773 = vmatpush1.bf16.msra.mxu0 %v1106
    %1774 = vmatprep.subr.bf16.mxu0 %v1103
    %1775 = vmatpush1.bf16.msra.mxu0 %v1102
    %1776 = vmatprep.subr.bf16.mxu0 %v1163
    %1777 = vmatpush2.bf16.msra.mxu0 %v1162
    %1778 = vmatprep.subr.bf16.mxu0 %v1159
    %1779 = vmatpush2.bf16.msra.mxu0 %v1158
    %1780 = vmatprep.subr.bf16.mxu0 %v1155
    %1781 = vmatpush2.bf16.msra.mxu0 %v1154
    %1782 = vmatprep.subr.bf16.mxu0 %v1151
    %1783 = vmatpush2.bf16.msra.mxu0 %v1150
    %1784 = vmatprep.subr.bf16.mxu0 %v1147
    %1785 = vmatpush2.bf16.msra.mxu0 %v1146
    %1786 = vmatprep.subr.bf16.mxu0 %v1143
    %1787 = vmatpush2.bf16.msra.mxu0 %v1142
    %1788 = vmatprep.subr.bf16.mxu0 %v1139
    %1789 = vmatpush2.bf16.msra.mxu0 %v1138
    %1790 = vmatprep.subr.bf16.mxu0 %v1135
    %1791 = vmatpush2.bf16.msra.mxu0 %v1134
    %1792 = vmatprep.mubr.bf16.mxu0 %v401
    %1793 = vmatmul.mubr.bf16.gmra.mxu0 %v400
    %v1794 = vpop.f32.mrf.mxu0
    %v1795 = vadd.f32 %v347, %v1794
    %v1796 = vpop.f32.mrf.mxu0
    %v1797 = vadd.f32 %v351, %v1796
    %v1798 = vpop.f32.mrf.mxu0
    %v1799 = vadd.f32 %v347, %v1798
    %v1800 = vpop.f32.mrf.mxu0
    %v1801 = vadd.f32 %v351, %v1800
    %1802 = vmatprep.mubr.bf16.mxu0 %v408
    %1803 = vmatmul.mubr.bf16.gmra.mxu0 %v407
    %v1804 = vpop.f32.mrf.mxu0
    %v1805 = vadd.f32 %v347, %v1804
    %v1806 = vpop.f32.mrf.mxu0
    %v1807 = vadd.f32 %v351, %v1806
    %v1808 = vpop.f32.mrf.mxu0
    %v1809 = vadd.f32 %v347, %v1808
    %v1810 = vpop.f32.mrf.mxu0
    %v1811 = vadd.f32 %v351, %v1810
    %1812 = vdwg.mxu0
    %1813 = vmatprep.subr.bf16.mxu0 %v1195
    %1814 = vmatpush1.bf16.msra.mxu0 %v1194
    %1815 = vmatprep.subr.bf16.mxu0 %v1191
    %1816 = vmatpush1.bf16.msra.mxu0 %v1190
    %1817 = vmatprep.subr.bf16.mxu0 %v1187
    %1818 = vmatpush1.bf16.msra.mxu0 %v1186
    %1819 = vmatprep.subr.bf16.mxu0 %v1183
    %1820 = vmatpush1.bf16.msra.mxu0 %v1182
    %1821 = vmatprep.subr.bf16.mxu0 %v1179
    %1822 = vmatpush1.bf16.msra.mxu0 %v1178
    %1823 = vmatprep.subr.bf16.mxu0 %v1175
    %1824 = vmatpush1.bf16.msra.mxu0 %v1174
    %1825 = vmatprep.subr.bf16.mxu0 %v1171
    %1826 = vmatpush1.bf16.msra.mxu0 %v1170
    %1827 = vmatprep.subr.bf16.mxu0 %v1167
    %1828 = vmatpush1.bf16.msra.mxu0 %v1166
    %1829 = vmatprep.subr.bf16.mxu0 %v1227
    %1830 = vmatpush2.bf16.msra.mxu0 %v1226
    %1831 = vmatprep.subr.bf16.mxu0 %v1223
    %1832 = vmatpush2.bf16.msra.mxu0 %v1222
    %1833 = vmatprep.subr.bf16.mxu0 %v1219
    %1834 = vmatpush2.bf16.msra.mxu0 %v1218
    %1835 = vmatprep.subr.bf16.mxu0 %v1215
    %1836 = vmatpush2.bf16.msra.mxu0 %v1214
    %1837 = vmatprep.subr.bf16.mxu0 %v1211
    %1838 = vmatpush2.bf16.msra.mxu0 %v1210
    %1839 = vmatprep.subr.bf16.mxu0 %v1207
    %1840 = vmatpush2.bf16.msra.mxu0 %v1206
    %1841 = vmatprep.subr.bf16.mxu0 %v1203
    %1842 = vmatpush2.bf16.msra.mxu0 %v1202
    %1843 = vmatprep.subr.bf16.mxu0 %v1199
    %1844 = vmatpush2.bf16.msra.mxu0 %v1198
    %1845 = vmatprep.mubr.bf16.mxu0 %v403
    %1846 = vmatmul.mubr.bf16.gmra.mxu0 %v402
    %v1847 = vpop.f32.mrf.mxu0
    %v1848 = vadd.f32 %v1795, %v1847
    %v1849 = vpop.f32.mrf.mxu0
    %v1850 = vadd.f32 %v1797, %v1849
    %v1851 = vpop.f32.mrf.mxu0
    %v1852 = vadd.f32 %v1799, %v1851
    %v1853 = vpop.f32.mrf.mxu0
    %v1854 = vadd.f32 %v1801, %v1853
    %1855 = vmatprep.mubr.bf16.mxu0 %v410
    %1856 = vmatmul.mubr.bf16.gmra.mxu0 %v409
    %v1857 = vpop.f32.mrf.mxu0
    %v1858 = vadd.f32 %v1805, %v1857
    %v1859 = vpop.f32.mrf.mxu0
    %v1860 = vadd.f32 %v1807, %v1859
    %v1861 = vpop.f32.mrf.mxu0
    %v1862 = vadd.f32 %v1809, %v1861
    %v1863 = vpop.f32.mrf.mxu0
    %v1864 = vadd.f32 %v1811, %v1863
    %1865 = vdwg.mxu0
    %1866 = vmatprep.subr.bf16.mxu0 %v1259
    %1867 = vmatpush1.bf16.msra.mxu0 %v1258
    %1868 = vmatprep.subr.bf16.mxu0 %v1255
    %1869 = vmatpush1.bf16.msra.mxu0 %v1254
    %1870 = vmatprep.subr.bf16.mxu0 %v1251
    %1871 = vmatpush1.bf16.msra.mxu0 %v1250
    %1872 = vmatprep.subr.bf16.mxu0 %v1247
    %1873 = vmatpush1.bf16.msra.mxu0 %v1246
    %1874 = vmatprep.subr.bf16.mxu0 %v1243
    %1875 = vmatpush1.bf16.msra.mxu0 %v1242
    %1876 = vmatprep.subr.bf16.mxu0 %v1239
    %1877 = vmatpush1.bf16.msra.mxu0 %v1238
    %1878 = vmatprep.subr.bf16.mxu0 %v1235
    %1879 = vmatpush1.bf16.msra.mxu0 %v1234
    %1880 = vmatprep.subr.bf16.mxu0 %v1231
    %1881 = vmatpush1.bf16.msra.mxu0 %v1230
    %1882 = vmatprep.subr.bf16.mxu0 %v1291
    %1883 = vmatpush2.bf16.msra.mxu0 %v1290
    %1884 = vmatprep.subr.bf16.mxu0 %v1287
    %1885 = vmatpush2.bf16.msra.mxu0 %v1286
    %1886 = vmatprep.subr.bf16.mxu0 %v1283
    %1887 = vmatpush2.bf16.msra.mxu0 %v1282
    %1888 = vmatprep.subr.bf16.mxu0 %v1279
    %1889 = vmatpush2.bf16.msra.mxu0 %v1278
    %1890 = vmatprep.subr.bf16.mxu0 %v1275
    %1891 = vmatpush2.bf16.msra.mxu0 %v1274
    %1892 = vmatprep.subr.bf16.mxu0 %v1271
    %1893 = vmatpush2.bf16.msra.mxu0 %v1270
    %1894 = vmatprep.subr.bf16.mxu0 %v1267
    %1895 = vmatpush2.bf16.msra.mxu0 %v1266
    %1896 = vmatprep.subr.bf16.mxu0 %v1263
    %1897 = vmatpush2.bf16.msra.mxu0 %v1262
    %1898 = vmatprep.mubr.bf16.mxu0 %v405
    %1899 = vmatmul.mubr.bf16.gmra.mxu0 %v404
    %v1900 = vpop.f32.mrf.mxu0
    %v1901 = vadd.f32 %v1848, %v1900
    %v1902 = vpop.f32.mrf.mxu0
    %v1903 = vadd.f32 %v1850, %v1902
    %v1904 = vpop.f32.mrf.mxu0
    %v1905 = vadd.f32 %v1852, %v1904
    %v1906 = vpop.f32.mrf.mxu0
    %v1907 = vadd.f32 %v1854, %v1906
    %1908 = vmatprep.mubr.bf16.mxu0 %v412
    %1909 = vmatmul.mubr.bf16.gmra.mxu0 %v411
    %v1910 = vpop.f32.mrf.mxu0
    %v1911 = vadd.f32 %v1858, %v1910
    %v1912 = vpop.f32.mrf.mxu0
    %v1913 = vadd.f32 %v1860, %v1912
    %v1914 = vpop.f32.mrf.mxu0
    %v1915 = vadd.f32 %v1862, %v1914
    %v1916 = vpop.f32.mrf.mxu0
    %v1917 = vadd.f32 %v1864, %v1916
    %1918 = vdwg.mxu0
    %1919 = vmatprep.subr.bf16.mxu0 %v1323
    %1920 = vmatpush1.bf16.msra.mxu0 %v1322
    %1921 = vmatprep.subr.bf16.mxu0 %v1319
    %1922 = vmatpush1.bf16.msra.mxu0 %v1318
    %1923 = vmatprep.subr.bf16.mxu0 %v1315
    %1924 = vmatpush1.bf16.msra.mxu0 %v1314
    %1925 = vmatprep.subr.bf16.mxu0 %v1311
    %1926 = vmatpush1.bf16.msra.mxu0 %v1310
    %1927 = vmatprep.subr.bf16.mxu0 %v1307
    %1928 = vmatpush1.bf16.msra.mxu0 %v1306
    %1929 = vmatprep.subr.bf16.mxu0 %v1303
    %1930 = vmatpush1.bf16.msra.mxu0 %v1302
    %1931 = vmatprep.subr.bf16.mxu0 %v1299
    %1932 = vmatpush1.bf16.msra.mxu0 %v1298
    %1933 = vmatprep.subr.bf16.mxu0 %v1295
    %1934 = vmatpush1.bf16.msra.mxu0 %v1294
    %1935 = vmatprep.subr.bf16.mxu0 0
    %1936 = vmatpush2.bf16.msra.mxu0 0
    %1937 = vmatprep.subr.bf16.mxu0 0
    %1938 = vmatpush2.bf16.msra.mxu0 0
    %1939 = vmatprep.subr.bf16.mxu0 0
    %1940 = vmatpush2.bf16.msra.mxu0 0
    %1941 = vmatprep.subr.bf16.mxu0 0
    %1942 = vmatpush2.bf16.msra.mxu0 0
    %1943 = vmatprep.subr.bf16.mxu0 0
    %1944 = vmatpush2.bf16.msra.mxu0 0
    %1945 = vmatprep.subr.bf16.mxu0 0
    %1946 = vmatpush2.bf16.msra.mxu0 0
    %1947 = vmatprep.subr.bf16.mxu0 0
    %1948 = vmatpush2.bf16.msra.mxu0 0
    %1949 = vmatprep.subr.bf16.mxu0 0
    %1950 = vmatpush2.bf16.msra.mxu0 0
    %1951 = vmatprep.mubr.bf16.mxu0 0
    %1952 = vmatmul.mubr.bf16.gmra.mxu0 %v406
    %v1953 = vpop.f32.mrf.mxu0
    %v1954 = vadd.f32 %v1901, %v1953
    %v1955 = vpop.f32.mrf.mxu0
    %v1956 = vadd.f32 %v1903, %v1955
    %v1957 = vpop.f32.mrf.mxu0
    %v1958 = vadd.f32 %v1905, %v1957
    %v1959 = vpop.f32.mrf.mxu0
    %v1960 = vadd.f32 %v1907, %v1959
    %1961 = vmatprep.mubr.bf16.mxu0 0
    %1962 = vmatmul.mubr.bf16.gmra.mxu0 %v413
    %v1963 = vpop.f32.mrf.mxu0
    %v1964 = vadd.f32 %v1911, %v1963
    %v1965 = vpop.f32.mrf.mxu0
    %v1966 = vadd.f32 %v1913, %v1965
    %v1967 = vpop.f32.mrf.mxu0
    %v1968 = vadd.f32 %v1915, %v1967
    %v1969 = vpop.f32.mrf.mxu0
    %v1970 = vadd.f32 %v1917, %v1969
    %1971 = vdwg.mxu0
    %v1972 = vmax.f32 %v1742, 0.0
    %v1973 = vmax.f32 %v1744, 0.0
    %v1974 = vmax.f32 %v1954, 0.0
    %v1975 = vmax.f32 %v1956, 0.0
    %v1976 = vmax.f32 %v1746, 0.0
    %v1977 = vmax.f32 %v1748, 0.0
    %v1978 = vmax.f32 %v1958, 0.0
    %v1979 = vmax.f32 %v1960, 0.0
    %v1980 = vmax.f32 %v1752, 0.0
    %v1981 = vmax.f32 %v1754, 0.0
    %v1982 = vmax.f32 %v1964, 0.0
    %v1983 = vmax.f32 %v1966, 0.0
    %v1984 = vmax.f32 %v1756, 0.0
    %v1985 = vmax.f32 %v1758, 0.0
    %v1986 = vmax.f32 %v1968, 0.0
    %v1987 = vmax.f32 %v1970, 0.0
    %v1988 = vpack.c.bf16 %v1976, %v1972
    %v1989 = vpack.c.bf16 %v1977, %v1973
    %v1990 = vpack.c.bf16 %v1978, %v1974
    %v1991 = vpack.c.bf16 %v1979, %v1975
    %v1992 = vpack.c.bf16 %v1984, %v1980
    %v1993 = vpack.c.bf16 %v1985, %v1981
    %v1994 = vpack.c.bf16 %v1986, %v1982
    %v1995 = vpack.c.bf16 %v1987, %v1983
    %v1996 = vld [vmem:[#allocation8] sm:$0xff]
    %v1997 = vld [vmem:[#allocation8 + $0x8] sm:$0xff]
    %v1998 = vld [vmem:[#allocation8 + $0x10] sm:$0xff]
    %v1999 = vld [vmem:[#allocation8 + $0x18] sm:$0xff]
    %v2000 = vld [vmem:[#allocation8 + $0x20] sm:$0xff]
    %v2001 = vld [vmem:[#allocation8 + $0x28] sm:$0xff]
    %v2002 = vld [vmem:[#allocation8 + $0x30] sm:$0xff]
    %v2003 = vld [vmem:[#allocation8 + $0x38] sm:$0xff]
    %v2004 = vld [vmem:[#allocation8 + $0x40] sm:$0xff]
    %v2005 = vld [vmem:[#allocation8 + $0x48] sm:$0xff]
    %v2006 = vld [vmem:[#allocation8 + $0x50] sm:$0xff]
    %v2007 = vld [vmem:[#allocation8 + $0x58] sm:$0xff]
    %v2008 = vld [vmem:[#allocation8 + $0x60] sm:$0xff]
    %v2009 = vld [vmem:[#allocation8 + $0x68] sm:$0xff]
    %v2010 = vld [vmem:[#allocation8 + $0x70] sm:$0xff]
    %v2011 = vld [vmem:[#allocation8 + $0x78] sm:$0xff]
    %v2012 = vld [vmem:[#allocation8 + $0x80] sm:$0xff]
    %v2013 = vld [vmem:[#allocation8 + $0x88] sm:$0xff]
    %v2014 = vld [vmem:[#allocation8 + $0x90] sm:$0xff]
    %v2015 = vld [vmem:[#allocation8 + $0x98] sm:$0xff]
    %v2016 = vld [vmem:[#allocation8 + $0xa0] sm:$0xff]
    %v2017 = vld [vmem:[#allocation8 + $0xa8] sm:$0xff]
    %v2018 = vld [vmem:[#allocation8 + $0xb0] sm:$0xff]
    %v2019 = vld [vmem:[#allocation8 + $0xb8] sm:$0xff]
    %v2020 = vld [vmem:[#allocation8 + $0xc0] sm:$0xff]
    %v2021 = vld [vmem:[#allocation8 + $0xc8] sm:$0xff]
    %v2022 = vld [vmem:[#allocation8 + $0xd0] sm:$0xff]
    %v2023 = vld [vmem:[#allocation8 + $0xd8] sm:$0xff]
    %v2024 = vld [vmem:[#allocation8 + $0xe0] sm:$0xff]
    %v2025 = vld [vmem:[#allocation8 + $0xe8] sm:$0xff]
    %v2026 = vld [vmem:[#allocation8 + $0xf0] sm:$0xff]
    %v2027 = vld [vmem:[#allocation8 + $0xf8] sm:$0xff]
    %v2028 = vld [vmem:[#allocation8 + $0x100] sm:$0xff]
    %v2029 = vld [vmem:[#allocation8 + $0x108] sm:$0xff]
    %v2030 = vld [vmem:[#allocation8 + $0x110] sm:$0xff]
    %v2031 = vld [vmem:[#allocation8 + $0x118] sm:$0xff]
    %v2032 = vld [vmem:[#allocation8 + $0x120] sm:$0xff]
    %v2033 = vld [vmem:[#allocation8 + $0x128] sm:$0xff]
    %v2034 = vld [vmem:[#allocation8 + $0x130] sm:$0xff]
    %v2035 = vld [vmem:[#allocation8 + $0x138] sm:$0xff]
    %v2036 = vld [vmem:[#allocation8 + $0x140] sm:$0xff]
    %v2037 = vld [vmem:[#allocation8 + $0x148] sm:$0xff]
    %v2038 = vld [vmem:[#allocation8 + $0x150] sm:$0xff]
    %v2039 = vld [vmem:[#allocation8 + $0x158] sm:$0xff]
    %v2040 = vld [vmem:[#allocation8 + $0x160] sm:$0xff]
    %v2041 = vld [vmem:[#allocation8 + $0x168] sm:$0xff]
    %v2042 = vld [vmem:[#allocation8 + $0x170] sm:$0xff]
    %v2043 = vld [vmem:[#allocation8 + $0x178] sm:$0xff]
    %v2044 = vld [vmem:[#allocation8 + $0x180] sm:$0xff]
    %v2045 = vld [vmem:[#allocation8 + $0x188] sm:$0xff]
    %v2046 = vld [vmem:[#allocation8 + $0x190] sm:$0xff]
    %v2047 = vld [vmem:[#allocation8 + $0x198] sm:$0xff]
    %v2048 = vld [vmem:[#allocation8 + $0x1a0] sm:$0xff]
    %v2049 = vld [vmem:[#allocation8 + $0x1a8] sm:$0xff]
    %v2050 = vld [vmem:[#allocation8 + $0x1b0] sm:$0xff]
    %v2051 = vld [vmem:[#allocation8 + $0x1b8] sm:$0xff]
    %v2052 = vld [vmem:[#allocation8 + $0x1c0] sm:$0xff]
    %v2053 = vld [vmem:[#allocation8 + $0x1c8] sm:$0xff]
    %v2054 = vld [vmem:[#allocation8 + $0x1d0] sm:$0xff]
    %v2055 = vld [vmem:[#allocation8 + $0x1d8] sm:$0xff]
    %v2056 = vld [vmem:[#allocation8 + $0x1e0] sm:$0xff]
    %v2057 = vld [vmem:[#allocation8 + $0x1e8] sm:$0xff]
    %v2058 = vld [vmem:[#allocation8 + $0x1f0] sm:$0xff]
    %v2059 = vld [vmem:[#allocation8 + $0x1f8] sm:$0xff]
    %v2060 = vld [vmem:[#allocation8 + $0x200] sm:$0xff]
    %v2061 = vld [vmem:[#allocation8 + $0x208] sm:$0xff]
    %v2062 = vld [vmem:[#allocation8 + $0x210] sm:$0xff]
    %v2063 = vld [vmem:[#allocation8 + $0x218] sm:$0xff]
    %v2064 = vld [vmem:[#allocation8 + $0x220] sm:$0xff]
    %v2065 = vld [vmem:[#allocation8 + $0x228] sm:$0xff]
    %v2066 = vld [vmem:[#allocation8 + $0x230] sm:$0xff]
    %v2067 = vld [vmem:[#allocation8 + $0x238] sm:$0xff]
    %v2068 = vld [vmem:[#allocation8 + $0x240] sm:$0xff]
    %v2069 = vld [vmem:[#allocation8 + $0x248] sm:$0xff]
    %v2070 = vld [vmem:[#allocation8 + $0x250] sm:$0xff]
    %v2071 = vld [vmem:[#allocation8 + $0x258] sm:$0xff]
    %v2072 = vld [vmem:[#allocation8 + $0x260] sm:$0xff]
    %v2073 = vld [vmem:[#allocation8 + $0x268] sm:$0xff]
    %v2074 = vld [vmem:[#allocation8 + $0x270] sm:$0xff]
    %v2075 = vld [vmem:[#allocation8 + $0x278] sm:$0xff]
    %v2076 = vld [vmem:[#allocation8 + $0x280] sm:$0xff]
    %v2077 = vld [vmem:[#allocation8 + $0x288] sm:$0xff]
    %v2078 = vld [vmem:[#allocation8 + $0x290] sm:$0xff]
    %v2079 = vld [vmem:[#allocation8 + $0x298] sm:$0xff]
    %v2080 = vld [vmem:[#allocation8 + $0x2a0] sm:$0xff]
    %v2081 = vld [vmem:[#allocation8 + $0x2a8] sm:$0xff]
    %v2082 = vld [vmem:[#allocation8 + $0x2b0] sm:$0xff]
    %v2083 = vld [vmem:[#allocation8 + $0x2b8] sm:$0xff]
    %v2084 = vld [vmem:[#allocation8 + $0x2c0] sm:$0xff]
    %v2085 = vld [vmem:[#allocation8 + $0x2c8] sm:$0xff]
    %v2086 = vld [vmem:[#allocation8 + $0x2d0] sm:$0xff]
    %v2087 = vld [vmem:[#allocation8 + $0x2d8] sm:$0xff]
    %v2088 = vld [vmem:[#allocation8 + $0x2e0] sm:$0xff]
    %v2089 = vld [vmem:[#allocation8 + $0x2e8] sm:$0xff]
    %v2090 = vld [vmem:[#allocation8 + $0x2f0] sm:$0xff]
    %v2091 = vld [vmem:[#allocation8 + $0x2f8] sm:$0xff]
    %v2092 = vld [vmem:[#allocation8 + $0x300] sm:$0xff]
    %v2093 = vld [vmem:[#allocation8 + $0x308] sm:$0xff]
    %v2094 = vld [vmem:[#allocation8 + $0x310] sm:$0xff]
    %v2095 = vld [vmem:[#allocation8 + $0x318] sm:$0xff]
    %v2096 = vld [vmem:[#allocation8 + $0x320] sm:$0xff]
    %v2097 = vld [vmem:[#allocation8 + $0x328] sm:$0xff]
    %v2098 = vld [vmem:[#allocation8 + $0x330] sm:$0xff]
    %v2099 = vld [vmem:[#allocation8 + $0x338] sm:$0xff]
    %v2100 = vld [vmem:[#allocation8 + $0x340] sm:$0xff]
    %v2101 = vld [vmem:[#allocation8 + $0x348] sm:$0xff]
    %v2102 = vld [vmem:[#allocation8 + $0x350] sm:$0xff]
    %v2103 = vld [vmem:[#allocation8 + $0x358] sm:$0xff]
    %v2104 = vld [vmem:[#allocation8 + $0x360] sm:$0xff]
    %v2105 = vld [vmem:[#allocation8 + $0x368] sm:$0xff]
    %v2106 = vld [vmem:[#allocation8 + $0x370] sm:$0xff]
    %v2107 = vld [vmem:[#allocation8 + $0x378] sm:$0xff]
    %v2108 = vld [vmem:[#allocation8 + $0x380] sm:$0xff]
    %v2109 = vld [vmem:[#allocation8 + $0x388] sm:$0xff]
    %v2110 = vld [vmem:[#allocation8 + $0x390] sm:$0xff]
    %v2111 = vld [vmem:[#allocation8 + $0x398] sm:$0xff]
    %v2112 = vld [vmem:[#allocation8 + $0x3a0] sm:$0xff]
    %v2113 = vld [vmem:[#allocation8 + $0x3a8] sm:$0xff]
    %v2114 = vld [vmem:[#allocation8 + $0x3b0] sm:$0xff]
    %v2115 = vld [vmem:[#allocation8 + $0x3b8] sm:$0xff]
    %v2116 = vld [vmem:[#allocation8 + $0x3c0] sm:$0xff]
    %v2117 = vld [vmem:[#allocation8 + $0x3c8] sm:$0xff]
    %v2118 = vld [vmem:[#allocation8 + $0x3d0] sm:$0xff]
    %v2119 = vld [vmem:[#allocation8 + $0x3d8] sm:$0xff]
    %v2120 = vld [vmem:[#allocation8 + $0x3e0] sm:$0xff]
    %v2121 = vld [vmem:[#allocation8 + $0x3e8] sm:$0xff]
    %v2122 = vld [vmem:[#allocation8 + $0x3f0] sm:$0xff]
    %v2123 = vld [vmem:[#allocation8 + $0x3f8] sm:$0xff]
    %v2124 = vld [vmem:[%s4] sm:$0xf]
    %v2126 = vlaneseq
    %v2127 = vshrl.u32 %v2126, 7
    %v2128 = vsub.s32 0, %v2127
    %v2129 = vrot.slane %v2124, %v2128
    %v2130 = vlaneseq
    %v2131 = vshrl.u32 %v2130, 7
    %v2132 = vsub.s32 1, %v2131
    %v2133 = vrot.slane %v2124, %v2132
    %v2134 = vlaneseq
    %v2135 = vshrl.u32 %v2134, 7
    %v2136 = vsub.s32 2, %v2135
    %v2137 = vrot.slane %v2124, %v2136
    %v2138 = vlaneseq
    %v2139 = vshrl.u32 %v2138, 7
    %v2140 = vsub.s32 3, %v2139
    %v2141 = vrot.slane %v2124, %v2140
    %v2274 = vunpack.c.l.b16 %v1996
    %v2275 = vunpack.c.h.b16 %v1996
    %v2276 = vunpack.c.l.b16 %v1997
    %v2277 = vunpack.c.h.b16 %v1997
    %v2278 = vunpack.c.l.b16 %v1998
    %v2279 = vunpack.c.h.b16 %v1998
    %v2280 = vunpack.c.l.b16 %v1999
    %v2281 = vunpack.c.h.b16 %v1999
    %v2282 = vunpack.c.l.b16 %v2000
    %v2283 = vunpack.c.h.b16 %v2000
    %v2284 = vunpack.c.l.b16 %v2001
    %v2285 = vunpack.c.h.b16 %v2001
    %v2286 = vunpack.c.l.b16 %v2002
    %v2287 = vunpack.c.h.b16 %v2002
    %v2288 = vunpack.c.l.b16 %v2003
    %v2289 = vunpack.c.h.b16 %v2003
    %v2290 = vunpack.c.l.b16 %v2004
    %v2291 = vunpack.c.h.b16 %v2004
    %v2292 = vunpack.c.l.b16 %v2005
    %v2293 = vunpack.c.h.b16 %v2005
    %v2294 = vunpack.c.l.b16 %v2006
    %v2295 = vunpack.c.h.b16 %v2006
    %v2296 = vunpack.c.l.b16 %v2007
    %v2297 = vunpack.c.h.b16 %v2007
    %v2298 = vunpack.c.l.b16 %v2008
    %v2299 = vunpack.c.h.b16 %v2008
    %v2300 = vunpack.c.l.b16 %v2009
    %v2301 = vunpack.c.h.b16 %v2009
    %v2302 = vunpack.c.l.b16 %v2010
    %v2303 = vunpack.c.h.b16 %v2010
    %v2304 = vunpack.c.l.b16 %v2011
    %v2305 = vunpack.c.h.b16 %v2011
    %v2306 = vunpack.c.l.b16 %v2012
    %v2307 = vunpack.c.h.b16 %v2012
    %v2308 = vunpack.c.l.b16 %v2013
    %v2309 = vunpack.c.h.b16 %v2013
    %v2310 = vunpack.c.l.b16 %v2014
    %v2311 = vunpack.c.h.b16 %v2014
    %v2312 = vunpack.c.l.b16 %v2015
    %v2313 = vunpack.c.h.b16 %v2015
    %v2314 = vunpack.c.l.b16 %v2016
    %v2315 = vunpack.c.h.b16 %v2016
    %v2316 = vunpack.c.l.b16 %v2017
    %v2317 = vunpack.c.h.b16 %v2017
    %v2318 = vunpack.c.l.b16 %v2018
    %v2319 = vunpack.c.h.b16 %v2018
    %v2320 = vunpack.c.l.b16 %v2019
    %v2321 = vunpack.c.h.b16 %v2019
    %v2322 = vunpack.c.l.b16 %v2020
    %v2323 = vunpack.c.h.b16 %v2020
    %v2324 = vunpack.c.l.b16 %v2021
    %v2325 = vunpack.c.h.b16 %v2021
    %v2326 = vunpack.c.l.b16 %v2022
    %v2327 = vunpack.c.h.b16 %v2022
    %v2328 = vunpack.c.l.b16 %v2023
    %v2329 = vunpack.c.h.b16 %v2023
    %v2330 = vunpack.c.l.b16 %v2024
    %v2331 = vunpack.c.h.b16 %v2024
    %v2332 = vunpack.c.l.b16 %v2025
    %v2333 = vunpack.c.h.b16 %v2025
    %v2334 = vunpack.c.l.b16 %v2026
    %v2335 = vunpack.c.h.b16 %v2026
    %v2336 = vunpack.c.l.b16 %v2027
    %v2337 = vunpack.c.h.b16 %v2027
    %v2338 = vunpack.c.l.b16 %v2028
    %v2339 = vunpack.c.h.b16 %v2028
    %v2340 = vunpack.c.l.b16 %v2029
    %v2341 = vunpack.c.h.b16 %v2029
    %v2342 = vunpack.c.l.b16 %v2030
    %v2343 = vunpack.c.h.b16 %v2030
    %v2344 = vunpack.c.l.b16 %v2031
    %v2345 = vunpack.c.h.b16 %v2031
    %v2346 = vunpack.c.l.b16 %v2032
    %v2347 = vunpack.c.h.b16 %v2032
    %v2348 = vunpack.c.l.b16 %v2033
    %v2349 = vunpack.c.h.b16 %v2033
    %v2350 = vunpack.c.l.b16 %v2034
    %v2351 = vunpack.c.h.b16 %v2034
    %v2352 = vunpack.c.l.b16 %v2035
    %v2353 = vunpack.c.h.b16 %v2035
    %v2354 = vunpack.c.l.b16 %v2036
    %v2355 = vunpack.c.h.b16 %v2036
    %v2356 = vunpack.c.l.b16 %v2037
    %v2357 = vunpack.c.h.b16 %v2037
    %v2358 = vunpack.c.l.b16 %v2038
    %v2359 = vunpack.c.h.b16 %v2038
    %v2360 = vunpack.c.l.b16 %v2039
    %v2361 = vunpack.c.h.b16 %v2039
    %v2362 = vunpack.c.l.b16 %v2040
    %v2363 = vunpack.c.h.b16 %v2040
    %v2364 = vunpack.c.l.b16 %v2041
    %v2365 = vunpack.c.h.b16 %v2041
    %v2366 = vunpack.c.l.b16 %v2042
    %v2367 = vunpack.c.h.b16 %v2042
    %v2368 = vunpack.c.l.b16 %v2043
    %v2369 = vunpack.c.h.b16 %v2043
    %v2370 = vunpack.c.l.b16 %v2044
    %v2371 = vunpack.c.h.b16 %v2044
    %v2372 = vunpack.c.l.b16 %v2045
    %v2373 = vunpack.c.h.b16 %v2045
    %v2374 = vunpack.c.l.b16 %v2046
    %v2375 = vunpack.c.h.b16 %v2046
    %v2376 = vunpack.c.l.b16 %v2047
    %v2377 = vunpack.c.h.b16 %v2047
    %v2378 = vunpack.c.l.b16 %v2048
    %v2379 = vunpack.c.h.b16 %v2048
    %v2380 = vunpack.c.l.b16 %v2049
    %v2381 = vunpack.c.h.b16 %v2049
    %v2382 = vunpack.c.l.b16 %v2050
    %v2383 = vunpack.c.h.b16 %v2050
    %v2384 = vunpack.c.l.b16 %v2051
    %v2385 = vunpack.c.h.b16 %v2051
    %v2386 = vunpack.c.l.b16 %v2052
    %v2387 = vunpack.c.h.b16 %v2052
    %v2388 = vunpack.c.l.b16 %v2053
    %v2389 = vunpack.c.h.b16 %v2053
    %v2390 = vunpack.c.l.b16 %v2054
    %v2391 = vunpack.c.h.b16 %v2054
    %v2392 = vunpack.c.l.b16 %v2055
    %v2393 = vunpack.c.h.b16 %v2055
    %v2394 = vunpack.c.l.b16 %v2056
    %v2395 = vunpack.c.h.b16 %v2056
    %v2396 = vunpack.c.l.b16 %v2057
    %v2397 = vunpack.c.h.b16 %v2057
    %v2398 = vunpack.c.l.b16 %v2058
    %v2399 = vunpack.c.h.b16 %v2058
    %v2400 = vunpack.c.l.b16 %v2059
    %v2401 = vunpack.c.h.b16 %v2059
    %v2402 = vunpack.c.l.b16 %v2060
    %v2403 = vunpack.c.h.b16 %v2060
    %v2404 = vunpack.c.l.b16 %v2061
    %v2405 = vunpack.c.h.b16 %v2061
    %v2406 = vunpack.c.l.b16 %v2062
    %v2407 = vunpack.c.h.b16 %v2062
    %v2408 = vunpack.c.l.b16 %v2063
    %v2409 = vunpack.c.h.b16 %v2063
    %v2410 = vunpack.c.l.b16 %v2064
    %v2411 = vunpack.c.h.b16 %v2064
    %v2412 = vunpack.c.l.b16 %v2065
    %v2413 = vunpack.c.h.b16 %v2065
    %v2414 = vunpack.c.l.b16 %v2066
    %v2415 = vunpack.c.h.b16 %v2066
    %v2416 = vunpack.c.l.b16 %v2067
    %v2417 = vunpack.c.h.b16 %v2067
    %v2418 = vunpack.c.l.b16 %v2068
    %v2419 = vunpack.c.h.b16 %v2068
    %v2420 = vunpack.c.l.b16 %v2069
    %v2421 = vunpack.c.h.b16 %v2069
    %v2422 = vunpack.c.l.b16 %v2070
    %v2423 = vunpack.c.h.b16 %v2070
    %v2424 = vunpack.c.l.b16 %v2071
    %v2425 = vunpack.c.h.b16 %v2071
    %v2426 = vunpack.c.l.b16 %v2072
    %v2427 = vunpack.c.h.b16 %v2072
    %v2428 = vunpack.c.l.b16 %v2073
    %v2429 = vunpack.c.h.b16 %v2073
    %v2430 = vunpack.c.l.b16 %v2074
    %v2431 = vunpack.c.h.b16 %v2074
    %v2432 = vunpack.c.l.b16 %v2075
    %v2433 = vunpack.c.h.b16 %v2075
    %v2434 = vunpack.c.l.b16 %v2076
    %v2435 = vunpack.c.h.b16 %v2076
    %v2436 = vunpack.c.l.b16 %v2077
    %v2437 = vunpack.c.h.b16 %v2077
    %v2438 = vunpack.c.l.b16 %v2078
    %v2439 = vunpack.c.h.b16 %v2078
    %v2440 = vunpack.c.l.b16 %v2079
    %v2441 = vunpack.c.h.b16 %v2079
    %v2442 = vunpack.c.l.b16 %v2080
    %v2443 = vunpack.c.h.b16 %v2080
    %v2444 = vunpack.c.l.b16 %v2081
    %v2445 = vunpack.c.h.b16 %v2081
    %v2446 = vunpack.c.l.b16 %v2082
    %v2447 = vunpack.c.h.b16 %v2082
    %v2448 = vunpack.c.l.b16 %v2083
    %v2449 = vunpack.c.h.b16 %v2083
    %v2450 = vunpack.c.l.b16 %v2084
    %v2451 = vunpack.c.h.b16 %v2084
    %v2452 = vunpack.c.l.b16 %v2085
    %v2453 = vunpack.c.h.b16 %v2085
    %v2454 = vunpack.c.l.b16 %v2086
    %v2455 = vunpack.c.h.b16 %v2086
    %v2456 = vunpack.c.l.b16 %v2087
    %v2457 = vunpack.c.h.b16 %v2087
    %v2458 = vunpack.c.l.b16 %v2088
    %v2459 = vunpack.c.h.b16 %v2088
    %v2460 = vunpack.c.l.b16 %v2089
    %v2461 = vunpack.c.h.b16 %v2089
    %v2462 = vunpack.c.l.b16 %v2090
    %v2463 = vunpack.c.h.b16 %v2090
    %v2464 = vunpack.c.l.b16 %v2091
    %v2465 = vunpack.c.h.b16 %v2091
    %v2466 = vunpack.c.l.b16 %v2092
    %v2467 = vunpack.c.h.b16 %v2092
    %v2468 = vunpack.c.l.b16 %v2093
    %v2469 = vunpack.c.h.b16 %v2093
    %v2470 = vunpack.c.l.b16 %v2094
    %v2471 = vunpack.c.h.b16 %v2094
    %v2472 = vunpack.c.l.b16 %v2095
    %v2473 = vunpack.c.h.b16 %v2095
    %v2474 = vunpack.c.l.b16 %v2096
    %v2475 = vunpack.c.h.b16 %v2096
    %v2476 = vunpack.c.l.b16 %v2097
    %v2477 = vunpack.c.h.b16 %v2097
    %v2478 = vunpack.c.l.b16 %v2098
    %v2479 = vunpack.c.h.b16 %v2098
    %v2480 = vunpack.c.l.b16 %v2099
    %v2481 = vunpack.c.h.b16 %v2099
    %v2482 = vunpack.c.l.b16 %v2100
    %v2483 = vunpack.c.h.b16 %v2100
    %v2484 = vunpack.c.l.b16 %v2101
    %v2485 = vunpack.c.h.b16 %v2101
    %v2486 = vunpack.c.l.b16 %v2102
    %v2487 = vunpack.c.h.b16 %v2102
    %v2488 = vunpack.c.l.b16 %v2103
    %v2489 = vunpack.c.h.b16 %v2103
    %v2490 = vunpack.c.l.b16 %v2104
    %v2491 = vunpack.c.h.b16 %v2104
    %v2492 = vunpack.c.l.b16 %v2105
    %v2493 = vunpack.c.h.b16 %v2105
    %v2494 = vunpack.c.l.b16 %v2106
    %v2495 = vunpack.c.h.b16 %v2106
    %v2496 = vunpack.c.l.b16 %v2107
    %v2497 = vunpack.c.h.b16 %v2107
    %v2498 = vunpack.c.l.b16 %v2108
    %v2499 = vunpack.c.h.b16 %v2108
    %v2500 = vunpack.c.l.b16 %v2109
    %v2501 = vunpack.c.h.b16 %v2109
    %v2502 = vunpack.c.l.b16 %v2110
    %v2503 = vunpack.c.h.b16 %v2110
    %v2504 = vunpack.c.l.b16 %v2111
    %v2505 = vunpack.c.h.b16 %v2111
    %v2506 = vunpack.c.l.b16 %v2112
    %v2507 = vunpack.c.h.b16 %v2112
    %v2508 = vunpack.c.l.b16 %v2113
    %v2509 = vunpack.c.h.b16 %v2113
    %v2510 = vunpack.c.l.b16 %v2114
    %v2511 = vunpack.c.h.b16 %v2114
    %v2512 = vunpack.c.l.b16 %v2115
    %v2513 = vunpack.c.h.b16 %v2115
    %v2514 = vunpack.c.l.b16 %v2116
    %v2515 = vunpack.c.h.b16 %v2116
    %v2516 = vunpack.c.l.b16 %v2117
    %v2517 = vunpack.c.h.b16 %v2117
    %v2518 = vunpack.c.l.b16 %v2118
    %v2519 = vunpack.c.h.b16 %v2118
    %v2520 = vunpack.c.l.b16 %v2119
    %v2521 = vunpack.c.h.b16 %v2119
    %v2522 = vunpack.c.l.b16 %v2120
    %v2523 = vunpack.c.h.b16 %v2120
    %v2524 = vunpack.c.l.b16 %v2121
    %v2525 = vunpack.c.h.b16 %v2121
    %v2526 = vunpack.c.l.b16 %v2122
    %v2527 = vunpack.c.h.b16 %v2122
    %v2528 = vunpack.c.l.b16 %v2123
    %v2529 = vunpack.c.h.b16 %v2123
    %v2530 = vpack.c.b16 %v2278, %v2274
    %v2531 = vpack.c.b16 %v2279, %v2275
    %v2532 = vpack.c.b16 %v2280, %v2276
    %v2533 = vpack.c.b16 %v2281, %v2277
    %v2534 = vpack.c.b16 %v2286, %v2282
    %v2535 = vpack.c.b16 %v2287, %v2283
    %v2536 = vpack.c.b16 %v2288, %v2284
    %v2537 = vpack.c.b16 %v2289, %v2285
    %v2538 = vpack.c.b16 %v2294, %v2290
    %v2539 = vpack.c.b16 %v2295, %v2291
    %v2540 = vpack.c.b16 %v2296, %v2292
    %v2541 = vpack.c.b16 %v2297, %v2293
    %v2542 = vpack.c.b16 %v2302, %v2298
    %v2543 = vpack.c.b16 %v2303, %v2299
    %v2544 = vpack.c.b16 %v2304, %v2300
    %v2545 = vpack.c.b16 %v2305, %v2301
    %v2546 = vpack.c.b16 %v2310, %v2306
    %v2547 = vpack.c.b16 %v2311, %v2307
    %v2548 = vpack.c.b16 %v2312, %v2308
    %v2549 = vpack.c.b16 %v2313, %v2309
    %v2550 = vpack.c.b16 %v2318, %v2314
    %v2551 = vpack.c.b16 %v2319, %v2315
    %v2552 = vpack.c.b16 %v2320, %v2316
    %v2553 = vpack.c.b16 %v2321, %v2317
    %v2554 = vpack.c.b16 %v2326, %v2322
    %v2555 = vpack.c.b16 %v2327, %v2323
    %v2556 = vpack.c.b16 %v2328, %v2324
    %v2557 = vpack.c.b16 %v2329, %v2325
    %v2558 = vpack.c.b16 %v2334, %v2330
    %v2559 = vpack.c.b16 %v2335, %v2331
    %v2560 = vpack.c.b16 %v2336, %v2332
    %v2561 = vpack.c.b16 %v2337, %v2333
    %v2562 = vpack.c.b16 %v2342, %v2338
    %v2563 = vpack.c.b16 %v2343, %v2339
    %v2564 = vpack.c.b16 %v2344, %v2340
    %v2565 = vpack.c.b16 %v2345, %v2341
    %v2566 = vpack.c.b16 %v2350, %v2346
    %v2567 = vpack.c.b16 %v2351, %v2347
    %v2568 = vpack.c.b16 %v2352, %v2348
    %v2569 = vpack.c.b16 %v2353, %v2349
    %v2570 = vpack.c.b16 %v2358, %v2354
    %v2571 = vpack.c.b16 %v2359, %v2355
    %v2572 = vpack.c.b16 %v2360, %v2356
    %v2573 = vpack.c.b16 %v2361, %v2357
    %v2574 = vpack.c.b16 %v2366, %v2362
    %v2575 = vpack.c.b16 %v2367, %v2363
    %v2576 = vpack.c.b16 %v2368, %v2364
    %v2577 = vpack.c.b16 %v2369, %v2365
    %v2578 = vpack.c.b16 %v2374, %v2370
    %v2579 = vpack.c.b16 %v2375, %v2371
    %v2580 = vpack.c.b16 %v2376, %v2372
    %v2581 = vpack.c.b16 %v2377, %v2373
    %v2582 = vpack.c.b16 %v2382, %v2378
    %v2583 = vpack.c.b16 %v2383, %v2379
    %v2584 = vpack.c.b16 %v2384, %v2380
    %v2585 = vpack.c.b16 %v2385, %v2381
    %v2586 = vpack.c.b16 %v2390, %v2386
    %v2587 = vpack.c.b16 %v2391, %v2387
    %v2588 = vpack.c.b16 %v2392, %v2388
    %v2589 = vpack.c.b16 %v2393, %v2389
    %v2590 = vpack.c.b16 %v2398, %v2394
    %v2591 = vpack.c.b16 %v2399, %v2395
    %v2592 = vpack.c.b16 %v2400, %v2396
    %v2593 = vpack.c.b16 %v2401, %v2397
    %v2594 = vpack.c.b16 %v2406, %v2402
    %v2595 = vpack.c.b16 %v2407, %v2403
    %v2596 = vpack.c.b16 %v2408, %v2404
    %v2597 = vpack.c.b16 %v2409, %v2405
    %v2598 = vpack.c.b16 %v2414, %v2410
    %v2599 = vpack.c.b16 %v2415, %v2411
    %v2600 = vpack.c.b16 %v2416, %v2412
    %v2601 = vpack.c.b16 %v2417, %v2413
    %v2602 = vpack.c.b16 %v2422, %v2418
    %v2603 = vpack.c.b16 %v2423, %v2419
    %v2604 = vpack.c.b16 %v2424, %v2420
    %v2605 = vpack.c.b16 %v2425, %v2421
    %v2606 = vpack.c.b16 %v2430, %v2426
    %v2607 = vpack.c.b16 %v2431, %v2427
    %v2608 = vpack.c.b16 %v2432, %v2428
    %v2609 = vpack.c.b16 %v2433, %v2429
    %v2610 = vpack.c.b16 %v2438, %v2434
    %v2611 = vpack.c.b16 %v2439, %v2435
    %v2612 = vpack.c.b16 %v2440, %v2436
    %v2613 = vpack.c.b16 %v2441, %v2437
    %v2614 = vpack.c.b16 %v2446, %v2442
    %v2615 = vpack.c.b16 %v2447, %v2443
    %v2616 = vpack.c.b16 %v2448, %v2444
    %v2617 = vpack.c.b16 %v2449, %v2445
    %v2618 = vpack.c.b16 %v2454, %v2450
    %v2619 = vpack.c.b16 %v2455, %v2451
    %v2620 = vpack.c.b16 %v2456, %v2452
    %v2621 = vpack.c.b16 %v2457, %v2453
    %v2622 = vpack.c.b16 %v2462, %v2458
    %v2623 = vpack.c.b16 %v2463, %v2459
    %v2624 = vpack.c.b16 %v2464, %v2460
    %v2625 = vpack.c.b16 %v2465, %v2461
    %v2626 = vpack.c.b16 %v2470, %v2466
    %v2627 = vpack.c.b16 %v2471, %v2467
    %v2628 = vpack.c.b16 %v2472, %v2468
    %v2629 = vpack.c.b16 %v2473, %v2469
    %v2630 = vpack.c.b16 %v2478, %v2474
    %v2631 = vpack.c.b16 %v2479, %v2475
    %v2632 = vpack.c.b16 %v2480, %v2476
    %v2633 = vpack.c.b16 %v2481, %v2477
    %v2634 = vpack.c.b16 %v2486, %v2482
    %v2635 = vpack.c.b16 %v2487, %v2483
    %v2636 = vpack.c.b16 %v2488, %v2484
    %v2637 = vpack.c.b16 %v2489, %v2485
    %v2638 = vpack.c.b16 %v2494, %v2490
    %v2639 = vpack.c.b16 %v2495, %v2491
    %v2640 = vpack.c.b16 %v2496, %v2492
    %v2641 = vpack.c.b16 %v2497, %v2493
    %v2642 = vpack.c.b16 %v2502, %v2498
    %v2643 = vpack.c.b16 %v2503, %v2499
    %v2644 = vpack.c.b16 %v2504, %v2500
    %v2645 = vpack.c.b16 %v2505, %v2501
    %v2646 = vpack.c.b16 %v2510, %v2506
    %v2647 = vpack.c.b16 %v2511, %v2507
    %v2648 = vpack.c.b16 %v2512, %v2508
    %v2649 = vpack.c.b16 %v2513, %v2509
    %v2650 = vpack.c.b16 %v2518, %v2514
    %v2651 = vpack.c.b16 %v2519, %v2515
    %v2652 = vpack.c.b16 %v2520, %v2516
    %v2653 = vpack.c.b16 %v2521, %v2517
    %v2654 = vpack.c.b16 %v2526, %v2522
    %v2655 = vpack.c.b16 %v2527, %v2523
    %v2656 = vpack.c.b16 %v2528, %v2524
    %v2657 = vpack.c.b16 %v2529, %v2525
    %2786 = vmatprep.subr.bf16.mxu0 %v2559
    %2787 = vmatpush1.bf16.msra.mxu0 %v2558
    %2788 = vmatprep.subr.bf16.mxu0 %v2555
    %2789 = vmatpush1.bf16.msra.mxu0 %v2554
    %2790 = vmatprep.subr.bf16.mxu0 %v2551
    %2791 = vmatpush1.bf16.msra.mxu0 %v2550
    %2792 = vmatprep.subr.bf16.mxu0 %v2547
    %2793 = vmatpush1.bf16.msra.mxu0 %v2546
    %2794 = vmatprep.subr.bf16.mxu0 %v2543
    %2795 = vmatpush1.bf16.msra.mxu0 %v2542
    %2796 = vmatprep.subr.bf16.mxu0 %v2539
    %2797 = vmatpush1.bf16.msra.mxu0 %v2538
    %2798 = vmatprep.subr.bf16.mxu0 %v2535
    %2799 = vmatpush1.bf16.msra.mxu0 %v2534
    %2800 = vmatprep.subr.bf16.mxu0 %v2531
    %2801 = vmatpush1.bf16.msra.mxu0 %v2530
    %2802 = vmatprep.subr.bf16.mxu0 %v2591
    %2803 = vmatpush2.bf16.msra.mxu0 %v2590
    %2804 = vmatprep.subr.bf16.mxu0 %v2587
    %2805 = vmatpush2.bf16.msra.mxu0 %v2586
    %2806 = vmatprep.subr.bf16.mxu0 %v2583
    %2807 = vmatpush2.bf16.msra.mxu0 %v2582
    %2808 = vmatprep.subr.bf16.mxu0 %v2579
    %2809 = vmatpush2.bf16.msra.mxu0 %v2578
    %2810 = vmatprep.subr.bf16.mxu0 %v2575
    %2811 = vmatpush2.bf16.msra.mxu0 %v2574
    %2812 = vmatprep.subr.bf16.mxu0 %v2571
    %2813 = vmatpush2.bf16.msra.mxu0 %v2570
    %2814 = vmatprep.subr.bf16.mxu0 %v2567
    %2815 = vmatpush2.bf16.msra.mxu0 %v2566
    %2816 = vmatprep.subr.bf16.mxu0 %v2563
    %2817 = vmatpush2.bf16.msra.mxu0 %v2562
    %2818 = vmatprep.mubr.bf16.mxu0 %v1989
    %2819 = vmatmul.mubr.bf16.gmra.mxu0 %v1988
    %v2820 = vpop.f32.mrf.mxu0
    %v2821 = vadd.f32 %v2129, %v2820
    %v2822 = vpop.f32.mrf.mxu0
    %v2823 = vadd.f32 %v2133, %v2822
    %v2824 = vpop.f32.mrf.mxu0
    %v2825 = vadd.f32 %v2129, %v2824
    %v2826 = vpop.f32.mrf.mxu0
    %v2827 = vadd.f32 %v2133, %v2826
    %2828 = vmatprep.mubr.bf16.mxu0 %v1993
    %2829 = vmatmul.mubr.bf16.gmra.mxu0 %v1992
    %v2830 = vpop.f32.mrf.mxu0
    %v2831 = vadd.f32 %v2129, %v2830
    %v2832 = vpop.f32.mrf.mxu0
    %v2833 = vadd.f32 %v2133, %v2832
    %v2834 = vpop.f32.mrf.mxu0
    %v2835 = vadd.f32 %v2129, %v2834
    %v2836 = vpop.f32.mrf.mxu0
    %v2837 = vadd.f32 %v2133, %v2836
    %2838 = vdwg.mxu0
    %2839 = vmatprep.subr.bf16.mxu0 %v2623
    %2840 = vmatpush1.bf16.msra.mxu0 %v2622
    %2841 = vmatprep.subr.bf16.mxu0 %v2619
    %2842 = vmatpush1.bf16.msra.mxu0 %v2618
    %2843 = vmatprep.subr.bf16.mxu0 %v2615
    %2844 = vmatpush1.bf16.msra.mxu0 %v2614
    %2845 = vmatprep.subr.bf16.mxu0 %v2611
    %2846 = vmatpush1.bf16.msra.mxu0 %v2610
    %2847 = vmatprep.subr.bf16.mxu0 %v2607
    %2848 = vmatpush1.bf16.msra.mxu0 %v2606
    %2849 = vmatprep.subr.bf16.mxu0 %v2603
    %2850 = vmatpush1.bf16.msra.mxu0 %v2602
    %2851 = vmatprep.subr.bf16.mxu0 %v2599
    %2852 = vmatpush1.bf16.msra.mxu0 %v2598
    %2853 = vmatprep.subr.bf16.mxu0 %v2595
    %2854 = vmatpush1.bf16.msra.mxu0 %v2594
    %2855 = vmatprep.subr.bf16.mxu0 %v2655
    %2856 = vmatpush2.bf16.msra.mxu0 %v2654
    %2857 = vmatprep.subr.bf16.mxu0 %v2651
    %2858 = vmatpush2.bf16.msra.mxu0 %v2650
    %2859 = vmatprep.subr.bf16.mxu0 %v2647
    %2860 = vmatpush2.bf16.msra.mxu0 %v2646
    %2861 = vmatprep.subr.bf16.mxu0 %v2643
    %2862 = vmatpush2.bf16.msra.mxu0 %v2642
    %2863 = vmatprep.subr.bf16.mxu0 %v2639
    %2864 = vmatpush2.bf16.msra.mxu0 %v2638
    %2865 = vmatprep.subr.bf16.mxu0 %v2635
    %2866 = vmatpush2.bf16.msra.mxu0 %v2634
    %2867 = vmatprep.subr.bf16.mxu0 %v2631
    %2868 = vmatpush2.bf16.msra.mxu0 %v2630
    %2869 = vmatprep.subr.bf16.mxu0 %v2627
    %2870 = vmatpush2.bf16.msra.mxu0 %v2626
    %2871 = vmatprep.mubr.bf16.mxu0 %v1991
    %2872 = vmatmul.mubr.bf16.gmra.mxu0 %v1990
    %v2873 = vpop.f32.mrf.mxu0
    %v2874 = vadd.f32 %v2821, %v2873
    %v2875 = vpop.f32.mrf.mxu0
    %v2876 = vadd.f32 %v2823, %v2875
    %v2877 = vpop.f32.mrf.mxu0
    %v2878 = vadd.f32 %v2825, %v2877
    %v2879 = vpop.f32.mrf.mxu0
    %v2880 = vadd.f32 %v2827, %v2879
    %2881 = vmatprep.mubr.bf16.mxu0 %v1995
    %2882 = vmatmul.mubr.bf16.gmra.mxu0 %v1994
    %v2883 = vpop.f32.mrf.mxu0
    %v2884 = vadd.f32 %v2831, %v2883
    %v2885 = vpop.f32.mrf.mxu0
    %v2886 = vadd.f32 %v2833, %v2885
    %v2887 = vpop.f32.mrf.mxu0
    %v2888 = vadd.f32 %v2835, %v2887
    %v2889 = vpop.f32.mrf.mxu0
    %v2890 = vadd.f32 %v2837, %v2889
    %2891 = vdwg.mxu0
    %2892 = vmatprep.subr.bf16.mxu0 %v2561
    %2893 = vmatpush1.bf16.msra.mxu0 %v2560
    %2894 = vmatprep.subr.bf16.mxu0 %v2557
    %2895 = vmatpush1.bf16.msra.mxu0 %v2556
    %2896 = vmatprep.subr.bf16.mxu0 %v2553
    %2897 = vmatpush1.bf16.msra.mxu0 %v2552
    %2898 = vmatprep.subr.bf16.mxu0 %v2549
    %2899 = vmatpush1.bf16.msra.mxu0 %v2548
    %2900 = vmatprep.subr.bf16.mxu0 %v2545
    %2901 = vmatpush1.bf16.msra.mxu0 %v2544
    %2902 = vmatprep.subr.bf16.mxu0 %v2541
    %2903 = vmatpush1.bf16.msra.mxu0 %v2540
    %2904 = vmatprep.subr.bf16.mxu0 %v2537
    %2905 = vmatpush1.bf16.msra.mxu0 %v2536
    %2906 = vmatprep.subr.bf16.mxu0 %v2533
    %2907 = vmatpush1.bf16.msra.mxu0 %v2532
    %2908 = vmatprep.subr.bf16.mxu0 %v2593
    %2909 = vmatpush2.bf16.msra.mxu0 %v2592
    %2910 = vmatprep.subr.bf16.mxu0 %v2589
    %2911 = vmatpush2.bf16.msra.mxu0 %v2588
    %2912 = vmatprep.subr.bf16.mxu0 %v2585
    %2913 = vmatpush2.bf16.msra.mxu0 %v2584
    %2914 = vmatprep.subr.bf16.mxu0 %v2581
    %2915 = vmatpush2.bf16.msra.mxu0 %v2580
    %2916 = vmatprep.subr.bf16.mxu0 %v2577
    %2917 = vmatpush2.bf16.msra.mxu0 %v2576
    %2918 = vmatprep.subr.bf16.mxu0 %v2573
    %2919 = vmatpush2.bf16.msra.mxu0 %v2572
    %2920 = vmatprep.subr.bf16.mxu0 %v2569
    %2921 = vmatpush2.bf16.msra.mxu0 %v2568
    %2922 = vmatprep.subr.bf16.mxu0 %v2565
    %2923 = vmatpush2.bf16.msra.mxu0 %v2564
    %2924 = vmatprep.mubr.bf16.mxu0 %v1989
    %2925 = vmatmul.mubr.bf16.gmra.mxu0 %v1988
    %v2926 = vpop.f32.mrf.mxu0
    %v2927 = vadd.f32 %v2137, %v2926
    %v2928 = vpop.f32.mrf.mxu0
    %v2929 = vadd.f32 %v2141, %v2928
    %v2930 = vpop.f32.mrf.mxu0
    %v2931 = vadd.f32 %v2137, %v2930
    %v2932 = vpop.f32.mrf.mxu0
    %v2933 = vadd.f32 %v2141, %v2932
    %2934 = vmatprep.mubr.bf16.mxu0 %v1993
    %2935 = vmatmul.mubr.bf16.gmra.mxu0 %v1992
    %v2936 = vpop.f32.mrf.mxu0
    %v2937 = vadd.f32 %v2137, %v2936
    %v2938 = vpop.f32.mrf.mxu0
    %v2939 = vadd.f32 %v2141, %v2938
    %v2940 = vpop.f32.mrf.mxu0
    %v2941 = vadd.f32 %v2137, %v2940
    %v2942 = vpop.f32.mrf.mxu0
    %v2943 = vadd.f32 %v2141, %v2942
    %2944 = vdwg.mxu0
    %2945 = vmatprep.subr.bf16.mxu0 %v2625
    %2946 = vmatpush1.bf16.msra.mxu0 %v2624
    %2947 = vmatprep.subr.bf16.mxu0 %v2621
    %2948 = vmatpush1.bf16.msra.mxu0 %v2620
    %2949 = vmatprep.subr.bf16.mxu0 %v2617
    %2950 = vmatpush1.bf16.msra.mxu0 %v2616
    %2951 = vmatprep.subr.bf16.mxu0 %v2613
    %2952 = vmatpush1.bf16.msra.mxu0 %v2612
    %2953 = vmatprep.subr.bf16.mxu0 %v2609
    %2954 = vmatpush1.bf16.msra.mxu0 %v2608
    %2955 = vmatprep.subr.bf16.mxu0 %v2605
    %2956 = vmatpush1.bf16.msra.mxu0 %v2604
    %2957 = vmatprep.subr.bf16.mxu0 %v2601
    %2958 = vmatpush1.bf16.msra.mxu0 %v2600
    %2959 = vmatprep.subr.bf16.mxu0 %v2597
    %2960 = vmatpush1.bf16.msra.mxu0 %v2596
    %2961 = vmatprep.subr.bf16.mxu0 %v2657
    %2962 = vmatpush2.bf16.msra.mxu0 %v2656
    %2963 = vmatprep.subr.bf16.mxu0 %v2653
    %2964 = vmatpush2.bf16.msra.mxu0 %v2652
    %2965 = vmatprep.subr.bf16.mxu0 %v2649
    %2966 = vmatpush2.bf16.msra.mxu0 %v2648
    %2967 = vmatprep.subr.bf16.mxu0 %v2645
    %2968 = vmatpush2.bf16.msra.mxu0 %v2644
    %2969 = vmatprep.subr.bf16.mxu0 %v2641
    %2970 = vmatpush2.bf16.msra.mxu0 %v2640
    %2971 = vmatprep.subr.bf16.mxu0 %v2637
    %2972 = vmatpush2.bf16.msra.mxu0 %v2636
    %2973 = vmatprep.subr.bf16.mxu0 %v2633
    %2974 = vmatpush2.bf16.msra.mxu0 %v2632
    %2975 = vmatprep.subr.bf16.mxu0 %v2629
    %2976 = vmatpush2.bf16.msra.mxu0 %v2628
    %2977 = vmatprep.mubr.bf16.mxu0 %v1991
    %2978 = vmatmul.mubr.bf16.gmra.mxu0 %v1990
    %v2979 = vpop.f32.mrf.mxu0
    %v2980 = vadd.f32 %v2927, %v2979
    %v2981 = vpop.f32.mrf.mxu0
    %v2982 = vadd.f32 %v2929, %v2981
    %v2983 = vpop.f32.mrf.mxu0
    %v2984 = vadd.f32 %v2931, %v2983
    %v2985 = vpop.f32.mrf.mxu0
    %v2986 = vadd.f32 %v2933, %v2985
    %2987 = vmatprep.mubr.bf16.mxu0 %v1995
    %2988 = vmatmul.mubr.bf16.gmra.mxu0 %v1994
    %v2989 = vpop.f32.mrf.mxu0
    %v2990 = vadd.f32 %v2937, %v2989
    %v2991 = vpop.f32.mrf.mxu0
    %v2992 = vadd.f32 %v2939, %v2991
    %v2993 = vpop.f32.mrf.mxu0
    %v2994 = vadd.f32 %v2941, %v2993
    %v2995 = vpop.f32.mrf.mxu0
    %v2996 = vadd.f32 %v2943, %v2995
    %2997 = vdwg.mxu0
    %v2998 = vmax.f32 %v2874, 0.0
    %v2999 = vmax.f32 %v2876, 0.0
    %v3000 = vmax.f32 %v2980, 0.0
    %v3001 = vmax.f32 %v2982, 0.0
    %v3002 = vmax.f32 %v2878, 0.0
    %v3003 = vmax.f32 %v2880, 0.0
    %v3004 = vmax.f32 %v2984, 0.0
    %v3005 = vmax.f32 %v2986, 0.0
    %v3006 = vmax.f32 %v2884, 0.0
    %v3007 = vmax.f32 %v2886, 0.0
    %v3008 = vmax.f32 %v2990, 0.0
    %v3009 = vmax.f32 %v2992, 0.0
    %v3010 = vmax.f32 %v2888, 0.0
    %v3011 = vmax.f32 %v2890, 0.0
    %v3012 = vmax.f32 %v2994, 0.0
    %v3013 = vmax.f32 %v2996, 0.0
    %v3014 = vpack.c.bf16 %v3002, %v2998
    %v3015 = vpack.c.bf16 %v3003, %v2999
    %v3016 = vpack.c.bf16 %v3004, %v3000
    %v3017 = vpack.c.bf16 %v3005, %v3001
    %v3018 = vpack.c.bf16 %v3010, %v3006
    %v3019 = vpack.c.bf16 %v3011, %v3007
    %v3020 = vpack.c.bf16 %v3012, %v3008
    %v3021 = vpack.c.bf16 %v3013, %v3009
    %v3022 = vld [vmem:[#allocation10] sm:$0xf]
    %v3023 = vld [vmem:[#allocation10 + $0x4] sm:$0xf]
    %v3024 = vld [vmem:[#allocation10 + $0x8] sm:$0xf]
    %v3025 = vld [vmem:[#allocation10 + $0xc] sm:$0xf]
    %v3026 = vld [vmem:[#allocation10 + $0x10] sm:$0xf]
    %v3027 = vld [vmem:[#allocation10 + $0x14] sm:$0xf]
    %v3028 = vld [vmem:[#allocation10 + $0x18] sm:$0xf]
    %v3029 = vld [vmem:[#allocation10 + $0x1c] sm:$0xf]
    %v3030 = vld [vmem:[#allocation10 + $0x20] sm:$0xf]
    %v3031 = vld [vmem:[#allocation10 + $0x24] sm:$0xf]
    %v3032 = vld [vmem:[#allocation10 + $0x28] sm:$0xf]
    %v3033 = vld [vmem:[#allocation10 + $0x2c] sm:$0xf]
    %v3034 = vld [vmem:[#allocation10 + $0x30] sm:$0xf]
    %v3035 = vld [vmem:[#allocation10 + $0x34] sm:$0xf]
    %v3036 = vld [vmem:[#allocation10 + $0x38] sm:$0xf]
    %v3037 = vld [vmem:[#allocation10 + $0x3c] sm:$0xf]
    %v3038 = vld [vmem:[#allocation10 + $0x40] sm:$0xf]
    %v3039 = vld [vmem:[#allocation10 + $0x44] sm:$0xf]
    %v3040 = vld [vmem:[#allocation10 + $0x48] sm:$0xf]
    %v3041 = vld [vmem:[#allocation10 + $0x4c] sm:$0xf]
    %v3042 = vld [vmem:[#allocation10 + $0x50] sm:$0xf]
    %v3043 = vld [vmem:[#allocation10 + $0x54] sm:$0xf]
    %v3044 = vld [vmem:[#allocation10 + $0x58] sm:$0xf]
    %v3045 = vld [vmem:[#allocation10 + $0x5c] sm:$0xf]
    %v3046 = vld [vmem:[#allocation10 + $0x60] sm:$0xf]
    %v3047 = vld [vmem:[#allocation10 + $0x64] sm:$0xf]
    %v3048 = vld [vmem:[#allocation10 + $0x68] sm:$0xf]
    %v3049 = vld [vmem:[#allocation10 + $0x6c] sm:$0xf]
    %v3050 = vld [vmem:[#allocation10 + $0x70] sm:$0xf]
    %v3051 = vld [vmem:[#allocation10 + $0x74] sm:$0xf]
    %v3052 = vld [vmem:[#allocation10 + $0x78] sm:$0xf]
    %v3053 = vld [vmem:[#allocation10 + $0x7c] sm:$0xf]
    %v3054 = vld [vmem:[#allocation10 + $0x80] sm:$0xf]
    %v3055 = vld [vmem:[#allocation10 + $0x84] sm:$0xf]
    %v3056 = vld [vmem:[#allocation10 + $0x88] sm:$0xf]
    %v3057 = vld [vmem:[#allocation10 + $0x8c] sm:$0xf]
    %v3058 = vld [vmem:[#allocation10 + $0x90] sm:$0xf]
    %v3059 = vld [vmem:[#allocation10 + $0x94] sm:$0xf]
    %v3060 = vld [vmem:[#allocation10 + $0x98] sm:$0xf]
    %v3061 = vld [vmem:[#allocation10 + $0x9c] sm:$0xf]
    %v3062 = vld [vmem:[#allocation10 + $0xa0] sm:$0xf]
    %v3063 = vld [vmem:[#allocation10 + $0xa4] sm:$0xf]
    %v3064 = vld [vmem:[#allocation10 + $0xa8] sm:$0xf]
    %v3065 = vld [vmem:[#allocation10 + $0xac] sm:$0xf]
    %v3066 = vld [vmem:[#allocation10 + $0xb0] sm:$0xf]
    %v3067 = vld [vmem:[#allocation10 + $0xb4] sm:$0xf]
    %v3068 = vld [vmem:[#allocation10 + $0xb8] sm:$0xf]
    %v3069 = vld [vmem:[#allocation10 + $0xbc] sm:$0xf]
    %v3070 = vld [vmem:[#allocation10 + $0xc0] sm:$0xf]
    %v3071 = vld [vmem:[#allocation10 + $0xc4] sm:$0xf]
    %v3072 = vld [vmem:[#allocation10 + $0xc8] sm:$0xf]
    %v3073 = vld [vmem:[#allocation10 + $0xcc] sm:$0xf]
    %v3074 = vld [vmem:[#allocation10 + $0xd0] sm:$0xf]
    %v3075 = vld [vmem:[#allocation10 + $0xd4] sm:$0xf]
    %v3076 = vld [vmem:[#allocation10 + $0xd8] sm:$0xf]
    %v3077 = vld [vmem:[#allocation10 + $0xdc] sm:$0xf]
    %v3078 = vld [vmem:[#allocation10 + $0xe0] sm:$0xf]
    %v3079 = vld [vmem:[#allocation10 + $0xe4] sm:$0xf]
    %v3080 = vld [vmem:[#allocation10 + $0xe8] sm:$0xf]
    %v3081 = vld [vmem:[#allocation10 + $0xec] sm:$0xf]
    %v3082 = vld [vmem:[#allocation10 + $0xf0] sm:$0xf]
    %v3083 = vld [vmem:[#allocation10 + $0xf4] sm:$0xf]
    %v3084 = vld [vmem:[#allocation10 + $0xf8] sm:$0xf]
    %v3085 = vld [vmem:[#allocation10 + $0xfc] sm:$0xf]
    %v3086 = vld [vmem:[%s6] sm:$0x1]
    %v3088 = vlaneseq
    %v3089 = vshrl.u32 %v3088, 7
    %v3090 = vsub.s32 0, %v3089
    %v3091 = vrot.slane %v3086, %v3090
    %v3157 = vunpack.c.l.b16 %v3022
    %v3158 = vunpack.c.l.b16 %v3023
    %v3159 = vunpack.c.l.b16 %v3024
    %v3160 = vunpack.c.l.b16 %v3025
    %v3161 = vunpack.c.l.b16 %v3026
    %v3162 = vunpack.c.l.b16 %v3027
    %v3163 = vunpack.c.l.b16 %v3028
    %v3164 = vunpack.c.l.b16 %v3029
    %v3165 = vunpack.c.l.b16 %v3030
    %v3166 = vunpack.c.l.b16 %v3031
    %v3167 = vunpack.c.l.b16 %v3032
    %v3168 = vunpack.c.l.b16 %v3033
    %v3169 = vunpack.c.l.b16 %v3034
    %v3170 = vunpack.c.l.b16 %v3035
    %v3171 = vunpack.c.l.b16 %v3036
    %v3172 = vunpack.c.l.b16 %v3037
    %v3173 = vunpack.c.l.b16 %v3038
    %v3174 = vunpack.c.l.b16 %v3039
    %v3175 = vunpack.c.l.b16 %v3040
    %v3176 = vunpack.c.l.b16 %v3041
    %v3177 = vunpack.c.l.b16 %v3042
    %v3178 = vunpack.c.l.b16 %v3043
    %v3179 = vunpack.c.l.b16 %v3044
    %v3180 = vunpack.c.l.b16 %v3045
    %v3181 = vunpack.c.l.b16 %v3046
    %v3182 = vunpack.c.l.b16 %v3047
    %v3183 = vunpack.c.l.b16 %v3048
    %v3184 = vunpack.c.l.b16 %v3049
    %v3185 = vunpack.c.l.b16 %v3050
    %v3186 = vunpack.c.l.b16 %v3051
    %v3187 = vunpack.c.l.b16 %v3052
    %v3188 = vunpack.c.l.b16 %v3053
    %v3189 = vunpack.c.l.b16 %v3054
    %v3190 = vunpack.c.l.b16 %v3055
    %v3191 = vunpack.c.l.b16 %v3056
    %v3192 = vunpack.c.l.b16 %v3057
    %v3193 = vunpack.c.l.b16 %v3058
    %v3194 = vunpack.c.l.b16 %v3059
    %v3195 = vunpack.c.l.b16 %v3060
    %v3196 = vunpack.c.l.b16 %v3061
    %v3197 = vunpack.c.l.b16 %v3062
    %v3198 = vunpack.c.l.b16 %v3063
    %v3199 = vunpack.c.l.b16 %v3064
    %v3200 = vunpack.c.l.b16 %v3065
    %v3201 = vunpack.c.l.b16 %v3066
    %v3202 = vunpack.c.l.b16 %v3067
    %v3203 = vunpack.c.l.b16 %v3068
    %v3204 = vunpack.c.l.b16 %v3069
    %v3205 = vunpack.c.l.b16 %v3070
    %v3206 = vunpack.c.l.b16 %v3071
    %v3207 = vunpack.c.l.b16 %v3072
    %v3208 = vunpack.c.l.b16 %v3073
    %v3209 = vunpack.c.l.b16 %v3074
    %v3210 = vunpack.c.l.b16 %v3075
    %v3211 = vunpack.c.l.b16 %v3076
    %v3212 = vunpack.c.l.b16 %v3077
    %v3213 = vunpack.c.l.b16 %v3078
    %v3214 = vunpack.c.l.b16 %v3079
    %v3215 = vunpack.c.l.b16 %v3080
    %v3216 = vunpack.c.l.b16 %v3081
    %v3217 = vunpack.c.l.b16 %v3082
    %v3218 = vunpack.c.l.b16 %v3083
    %v3219 = vunpack.c.l.b16 %v3084
    %v3220 = vunpack.c.l.b16 %v3085
    %v3221 = vpack.c.b16 %v3158, %v3157
    %v3222 = vpack.c.b16 %v3160, %v3159
    %v3223 = vpack.c.b16 %v3162, %v3161
    %v3224 = vpack.c.b16 %v3164, %v3163
    %v3225 = vpack.c.b16 %v3166, %v3165
    %v3226 = vpack.c.b16 %v3168, %v3167
    %v3227 = vpack.c.b16 %v3170, %v3169
    %v3228 = vpack.c.b16 %v3172, %v3171
    %v3229 = vpack.c.b16 %v3174, %v3173
    %v3230 = vpack.c.b16 %v3176, %v3175
    %v3231 = vpack.c.b16 %v3178, %v3177
    %v3232 = vpack.c.b16 %v3180, %v3179
    %v3233 = vpack.c.b16 %v3182, %v3181
    %v3234 = vpack.c.b16 %v3184, %v3183
    %v3235 = vpack.c.b16 %v3186, %v3185
    %v3236 = vpack.c.b16 %v3188, %v3187
    %v3237 = vpack.c.b16 %v3190, %v3189
    %v3238 = vpack.c.b16 %v3192, %v3191
    %v3239 = vpack.c.b16 %v3194, %v3193
    %v3240 = vpack.c.b16 %v3196, %v3195
    %v3241 = vpack.c.b16 %v3198, %v3197
    %v3242 = vpack.c.b16 %v3200, %v3199
    %v3243 = vpack.c.b16 %v3202, %v3201
    %v3244 = vpack.c.b16 %v3204, %v3203
    %v3245 = vpack.c.b16 %v3206, %v3205
    %v3246 = vpack.c.b16 %v3208, %v3207
    %v3247 = vpack.c.b16 %v3210, %v3209
    %v3248 = vpack.c.b16 %v3212, %v3211
    %v3249 = vpack.c.b16 %v3214, %v3213
    %v3250 = vpack.c.b16 %v3216, %v3215
    %v3251 = vpack.c.b16 %v3218, %v3217
    %v3252 = vpack.c.b16 %v3220, %v3219
    %3285 = vmatprep.subr.bf16.mxu0 0
    %3286 = vmatpush1.bf16.msra.mxu0 %v3228
    %3287 = vmatprep.subr.bf16.mxu0 0
    %3288 = vmatpush1.bf16.msra.mxu0 %v3227
    %3289 = vmatprep.subr.bf16.mxu0 0
    %3290 = vmatpush1.bf16.msra.mxu0 %v3226
    %3291 = vmatprep.subr.bf16.mxu0 0
    %3292 = vmatpush1.bf16.msra.mxu0 %v3225
    %3293 = vmatprep.subr.bf16.mxu0 0
    %3294 = vmatpush1.bf16.msra.mxu0 %v3224
    %3295 = vmatprep.subr.bf16.mxu0 0
    %3296 = vmatpush1.bf16.msra.mxu0 %v3223
    %3297 = vmatprep.subr.bf16.mxu0 0
    %3298 = vmatpush1.bf16.msra.mxu0 %v3222
    %3299 = vmatprep.subr.bf16.mxu0 0
    %3300 = vmatpush1.bf16.msra.mxu0 %v3221
    %3301 = vmatprep.subr.bf16.mxu0 0
    %3302 = vmatpush2.bf16.msra.mxu0 %v3236
    %3303 = vmatprep.subr.bf16.mxu0 0
    %3304 = vmatpush2.bf16.msra.mxu0 %v3235
    %3305 = vmatprep.subr.bf16.mxu0 0
    %3306 = vmatpush2.bf16.msra.mxu0 %v3234
    %3307 = vmatprep.subr.bf16.mxu0 0
    %3308 = vmatpush2.bf16.msra.mxu0 %v3233
    %3309 = vmatprep.subr.bf16.mxu0 0
    %3310 = vmatpush2.bf16.msra.mxu0 %v3232
    %3311 = vmatprep.subr.bf16.mxu0 0
    %3312 = vmatpush2.bf16.msra.mxu0 %v3231
    %3313 = vmatprep.subr.bf16.mxu0 0
    %3314 = vmatpush2.bf16.msra.mxu0 %v3230
    %3315 = vmatprep.subr.bf16.mxu0 0
    %3316 = vmatpush2.bf16.msra.mxu0 %v3229
    %3317 = vmatprep.mubr.bf16.mxu0 %v3015
    %3318 = vmatmul.mubr.bf16.gmra.mxu0 %v3014
    %v3319 = vpop.f32.mrf.mxu0
    %v3320 = vadd.f32 %v3091, %v3319
    %v3321 = vpop.f32.mrf.mxu0
    %v3322 = vpop.f32.mrf.mxu0
    %v3323 = vadd.f32 %v3091, %v3322
    %v3324 = vpop.f32.mrf.mxu0
    %3325 = vmatprep.mubr.bf16.mxu0 %v3019
    %3326 = vmatmul.mubr.bf16.gmra.mxu0 %v3018
    %v3327 = vpop.f32.mrf.mxu0
    %v3328 = vadd.f32 %v3091, %v3327
    %v3329 = vpop.f32.mrf.mxu0
    %v3330 = vpop.f32.mrf.mxu0
    %v3331 = vadd.f32 %v3091, %v3330
    %v3332 = vpop.f32.mrf.mxu0
    %3333 = vdwg.mxu0
    %3334 = vmatprep.subr.bf16.mxu0 0
    %3335 = vmatpush1.bf16.msra.mxu0 %v3244
    %3336 = vmatprep.subr.bf16.mxu0 0
    %3337 = vmatpush1.bf16.msra.mxu0 %v3243
    %3338 = vmatprep.subr.bf16.mxu0 0
    %3339 = vmatpush1.bf16.msra.mxu0 %v3242
    %3340 = vmatprep.subr.bf16.mxu0 0
    %3341 = vmatpush1.bf16.msra.mxu0 %v3241
    %3342 = vmatprep.subr.bf16.mxu0 0
    %3343 = vmatpush1.bf16.msra.mxu0 %v3240
    %3344 = vmatprep.subr.bf16.mxu0 0
    %3345 = vmatpush1.bf16.msra.mxu0 %v3239
    %3346 = vmatprep.subr.bf16.mxu0 0
    %3347 = vmatpush1.bf16.msra.mxu0 %v3238
    %3348 = vmatprep.subr.bf16.mxu0 0
    %3349 = vmatpush1.bf16.msra.mxu0 %v3237
    %3350 = vmatprep.subr.bf16.mxu0 0
    %3351 = vmatpush2.bf16.msra.mxu0 %v3252
    %3352 = vmatprep.subr.bf16.mxu0 0
    %3353 = vmatpush2.bf16.msra.mxu0 %v3251
    %3354 = vmatprep.subr.bf16.mxu0 0
    %3355 = vmatpush2.bf16.msra.mxu0 %v3250
    %3356 = vmatprep.subr.bf16.mxu0 0
    %3357 = vmatpush2.bf16.msra.mxu0 %v3249
    %3358 = vmatprep.subr.bf16.mxu0 0
    %3359 = vmatpush2.bf16.msra.mxu0 %v3248
    %3360 = vmatprep.subr.bf16.mxu0 0
    %3361 = vmatpush2.bf16.msra.mxu0 %v3247
    %3362 = vmatprep.subr.bf16.mxu0 0
    %3363 = vmatpush2.bf16.msra.mxu0 %v3246
    %3364 = vmatprep.subr.bf16.mxu0 0
    %3365 = vmatpush2.bf16.msra.mxu0 %v3245
    %3366 = vmatprep.mubr.bf16.mxu0 %v3017
    %3367 = vmatmul.mubr.bf16.gmra.mxu0 %v3016
    %v3368 = vpop.f32.mrf.mxu0
    %v3369 = vadd.f32 %v3320, %v3368
    %v3370 = vpop.f32.mrf.mxu0
    %v3371 = vpop.f32.mrf.mxu0
    %v3372 = vadd.f32 %v3323, %v3371
    %v3373 = vpop.f32.mrf.mxu0
    %3374 = vmatprep.mubr.bf16.mxu0 %v3021
    %3375 = vmatmul.mubr.bf16.gmra.mxu0 %v3020
    %v3376 = vpop.f32.mrf.mxu0
    %v3377 = vadd.f32 %v3328, %v3376
    %v3378 = vpop.f32.mrf.mxu0
    %v3379 = vpop.f32.mrf.mxu0
    %v3380 = vadd.f32 %v3331, %v3379
    %v3381 = vpop.f32.mrf.mxu0
    %3382 = vdwg.mxu0
    %v3383 = vlaneseq
    %v3384 = vand.u32 %v3383, 127
    %vm3385 = vcmp.lt.s32.totalorder %v3384, 10
    %v3386 = vsel %vm3385, %v3369, -1e+30
    %v3387 = vsel %vm3385, %v3372, -1e+30
    %v3388 = vsel %vm3385, %v3377, -1e+30
    %v3389 = vsel %vm3385, %v3380, -1e+30
    %3390 = vmax.xlane.f32.xlu0 %v3386
    %v3391 = vpop.xlane.xlu0 %3390
    %3392 = vmax.xlane.f32.xlu0 %v3387
    %v3393 = vpop.xlane.xlu0 %3392
    %3394 = vmax.xlane.f32.xlu0 %v3388
    %v3395 = vpop.xlane.xlu0 %3394
    %3396 = vmax.xlane.f32.xlu0 %v3389
    %v3397 = vpop.xlane.xlu0 %3396
    %v3398 = vsub.f32 %v3386, %v3391
    %v3399 = vsub.f32 %v3387, %v3393
    %v3400 = vsub.f32 %v3388, %v3395
    %v3401 = vsub.f32 %v3389, %v3397
    %v3402 = vmul.f32 %v3398, 1.442695
    %v3403 = vpow.pop %v3402
    %v3404 = vmul.f32 %v3399, 1.442695
    %v3405 = vpow.pop %v3404
    %v3406 = vmul.f32 %v3400, 1.442695
    %v3407 = vpow.pop %v3406
    %v3408 = vmul.f32 %v3401, 1.442695
    %v3409 = vpow.pop %v3408
    %3410 = vadd.xlane.f32.xlu0 %v3403
    %v3411 = vpop.xlane.xlu0 %3410
    %3412 = vadd.xlane.f32.xlu0 %v3405
    %v3413 = vpop.xlane.xlu0 %3412
    %3414 = vadd.xlane.f32.xlu0 %v3407
    %v3415 = vpop.xlane.xlu0 %3414
    %3416 = vadd.xlane.f32.xlu0 %v3409
    %v3417 = vpop.xlane.xlu0 %3416
    %v3418 = vlog2.pop %v3411
    %v3419 = vmul.f32 %v3418, 0.6931472
    %v3420 = vlog2.pop %v3413
    %v3421 = vmul.f32 %v3420, 0.6931472
    %v3422 = vlog2.pop %v3415
    %v3423 = vmul.f32 %v3422, 0.6931472
    %v3424 = vlog2.pop %v3417
    %v3425 = vmul.f32 %v3424, 0.6931472
    %v3426 = vsub.f32 %v3398, %v3419
    %v3427 = vsub.f32 %v3399, %v3421
    %v3428 = vsub.f32 %v3400, %v3423
    %v3429 = vsub.f32 %v3401, %v3425
    %3430 = vst [vmem:[#allocation11] sm:$0xff] %v3426
    %3431 = vst [vmem:[#allocation11 + $0x8] sm:$0xff] %v3427
    %3432 = vst [vmem:[#allocation11 + $0x10] sm:$0xff] %v3428
    %3433 = vst [vmem:[#allocation11 + $0x18] sm:$0xff] %v3429
    // Predicated region
    $region50: #{tpu_custom_call.1} parent=1 // pred_check
      _
    $region51: #{tpu_custom_call.1} parent=1 // pred_check_branch
      %3435 = sbr.rel (0) target = $region53
    $region52: #{tpu_custom_call.1} parent=1 // pred_region
      %s3437 = ssub.s32 512, 512
      %3438 = vsyncadd [#allocation4], %s3437
      %s3439 = sshll.u32 [#allocation11], 4
      %s3440 = int_to_ptr.vmem [resolvable:$true] %s3439
      %3445 = dma.vmem_to_hbm [thread:$0]  %s3440, 512, %s7, [#allocation4], 128, 128, 8
    $region53: #{tpu_custom_call.1} parent=1 // pred_fallthru
      _
    // Predicated region
    $region54: #{tpu_custom_call.1} parent=1 // pred_check
      _
    $region55: #{tpu_custom_call.1} parent=1 // pred_check_branch
      %3447 = sbr.rel (0) target = $region57
    $region56: #{tpu_custom_call.1} parent=1 // pred_region
      %3448 = dma.done [#allocation4], 512
    $region57: #{tpu_custom_call.1} parent=1 // pred_fallthru
      _
    %3449 = vsyncpa [#allocation3], 1
    %3450 = vsyncpa [#allocation6], 1
    %3451 = vsyncpa [#allocation9], 1
    %3452 = vsyncpa [#allocation4], 1

</llo_original>
